<compile_context>
chip_gen: v7x
topology: tpu7x:2x2x1
jax: 0.10.0
libtpu: 0.0.40
codegen_flags: <defaults>
</compile_context>

<pallas_src>
import functools

import numpy as np
import jax
import jax.numpy as jnp
from jax import lax
from jax.experimental import pallas as pl
from jax.experimental.pallas import tpu as pltpu

_BN_EPS = 1e-5
_LANE = 128


# ----------------------------------------------------------------------------- kernel
def _mfa_kernel(n_tok, b_blk, mm_dtype, *refs):
    """Fused CNL+PNL forward for one block of `b_blk` batch elements."""
    (xh_ref, xl_ref, *w_refs, out_ref) = refs
    cnl_w = w_refs[:10]
    pnl_w = w_refs[10:]

    f32 = jnp.float32
    xh = xh_ref[...].astype(f32)          # (b_blk*N, C_pad) — lane-dense channels
    xl = xl_ref[...].astype(f32)

    def mm(a, b):                         # MXU matmul, f32 accumulation
        return jnp.dot(a.astype(mm_dtype), b.astype(mm_dtype),
                       preferred_element_type=f32)

    def block_diag_attention(theta, phi, g):
        # Attention is independent per batch element -> block-diagonal over the
        # flat (b_blk*N, P) slab.  b_blk is small and static, so unroll.
        # TODO(synk): for ViT-scale N the (N,N) energy should be chunked
        # flash-style over KV (v7x has only 64 MiB VMEM) instead of held whole.
        ys = []
        for b in range(b_blk):
            s = slice(b * n_tok, (b + 1) * n_tok)
            # theta @ phi^T without materialising a transpose of phi
            energy = lax.dot_general(
                theta[s].astype(mm_dtype), phi[s].astype(mm_dtype),
                dimension_numbers=(((1,), (1,)), ((), ())),
                preferred_element_type=f32)            # (N, N); 1/N folded into Wt/bt
            ys.append(mm(energy, g[s]))                # (N, P)
        return ys[0] if b_blk == 1 else jnp.concatenate(ys, axis=0)

    def nonlocal_block(xh_v, xl_v, p):
        wg, bg, wt, bt, wp, bp, ww, bw, scale, shift = p
        g_x   = mm(xl_v, wg[...]) + bg[...]            # 1x1 convs == channel matmuls
        theta = mm(xh_v, wt[...]) + bt[...]            # Wt/bt already carry the 1/N scale
        phi   = mm(xl_v, wp[...]) + bp[...]
        y = block_diag_attention(theta, phi, g_x)      # (b_blk*N, P)
        y = mm(y, ww[...]) + bw[...]                   # 1x1 conv back to C_pad channels
        y = y * scale[...] + shift[...]                # folded eval-mode BatchNorm1d
        return y + xh_v                                # residual

    z = nonlocal_block(xh, xl, cnl_w)                  # CNL
    out = nonlocal_block(z, xl, pnl_w)                 # PNL (z never leaves VMEM)
    out_ref[...] = out.astype(out_ref.dtype)


# ----------------------------------------------------------------------------- wrapper
def _prep_params(p, n_tok, c_in, c_pad):
    """Pad channels to lane width, fold 1/N into Wt/bt, fold eval-BN into scale/shift."""
    pad_rows = lambda w: jnp.pad(w, ((0, c_pad - c_in), (0, 0)))
    pad_cols = lambda w: jnp.pad(w, ((0, 0), (0, c_pad - c_in)))
    inv_n = 1.0 / n_tok
    scale = p["gamma"] / jnp.sqrt(p["running_var"] + _BN_EPS)
    shift = p["beta"] - p["running_mean"] * scale
    return (
        pad_rows(p["wg"]), p["bg"],
        pad_rows(p["wt"]) * inv_n, p["bt"] * inv_n,
        pad_rows(p["wp"]), p["bp"],
        pad_cols(p["ww"]), pad_cols(p["bw"]),
        pad_cols(scale), pad_cols(shift),
    )


def _pick_b_blk(batch, n_tok):
    """Enough rows per grid step to amortise pipeline overhead (~0.35us/step),
    while keeping >=2 grid steps so both v7x TensorCores get work when possible."""
    target_rows = 512
    b_blk = max(1, min(batch, target_rows // max(n_tok, 1)))
    while b_blk > 1 and batch % b_blk:
        b_blk -= 1
    if batch >= 2 and batch // b_blk < 2:
        b_blk = max(1, b_blk // 2)
        while b_blk > 1 and batch % b_blk:
            b_blk -= 1
    return b_blk


def mfa_block(x, x0, cnl_params, pnl_params, *, b_blk=None,
              compute_dtype=jnp.float32):
    """MFA_Block.forward: z = CNL(x, x0); return PNL(z, x0).  x, x0: (B, N, C)."""
    B, N, C = x.shape
    assert x0.shape == (B, N, C)
    if N % 8:
        # TODO(synk): ragged N (e.g. ViT N=197) needs in-kernel masking of pad tokens.
        raise NotImplementedError("token count must be a multiple of 8")
    if b_blk is None:
        b_blk = _pick_b_blk(B, N)
    assert B % b_blk == 0

    c_pad = pl.cdiv(C, _LANE) * _LANE            # lane-dense channel axis

    def pad_feat(a):                             # (B,N,C) -> (B*N, C_pad), zero pad channels
        a = jnp.pad(a, ((0, 0), (0, 0), (0, c_pad - C)))
        return a.reshape(B * N, c_pad)

    xh2, xl2 = pad_feat(x), pad_feat(x0)
    weights = list(_prep_params(cnl_params, N, C, c_pad)) + \
              list(_prep_params(pnl_params, N, C, c_pad))

    feat_spec = pl.BlockSpec((b_blk * N, c_pad), lambda i: (i, 0))
    weight_specs = [pl.BlockSpec(w.shape, lambda i: (0, 0)) for w in weights]

    kernel = functools.partial(_mfa_kernel, N, b_blk, jnp.dtype(compute_dtype))
    out = pl.pallas_call(
        kernel,
        out_shape=jax.ShapeDtypeStruct((B * N, c_pad), x.dtype),
        grid=(B // b_blk,),
        in_specs=[feat_spec, feat_spec] + weight_specs,
        out_specs=feat_spec,
        compiler_params=pltpu.CompilerParams(
            dimension_semantics=("parallel",)),
    )(xh2, xl2, *weights)

    return out.reshape(B, N, c_pad)[:, :, :C]


# ----------------------------------------------------------------------------- params / reference
def init_nl_params(key, high_dim, proj_dim):
    """Parameters for one CNL/PNL block (PyTorch-faithful init).

    Conv weights are stored pre-transposed as (in_ch, out_ch) so the kernel does
    x @ W.  BN weight/bias follow the module's nn.init.constant_(0); running
    stats follow BatchNorm1d defaults (mean 0, var 1).
    """
    # TODO(synk): training-mode batch statistics not modelled (eval-mode BN only).
    ks = jax.random.split(key, 8)
    s = 0.02
    w = lambda k, shape: (s * jax.random.normal(k, shape)).astype(jnp.float32)
    return {
        "wg": w(ks[0], (high_dim, proj_dim)), "bg": w(ks[1], (1, proj_dim)),
        "wt": w(ks[2], (high_dim, proj_dim)), "bt": w(ks[3], (1, proj_dim)),
        "wp": w(ks[4], (high_dim, proj_dim)), "bp": w(ks[5], (1, proj_dim)),
        "ww": w(ks[6], (proj_dim, high_dim)), "bw": w(ks[7], (1, high_dim)),
        "gamma": jnp.zeros((1, high_dim), jnp.float32),
        "beta": jnp.zeros((1, high_dim), jnp.float32),
        "running_mean": jnp.zeros((1, high_dim), jnp.float32),
        "running_var": jnp.ones((1, high_dim), jnp.float32),
    }


def _randomize_bn(key, p):
    """Non-trivial BN params so the test exercises the full attention path
    (with the module's zero-init gamma/beta the BN output is identically 0)."""
    k1, k2, k3, k4 = jax.random.split(key, 4)
    c = p["gamma"].shape[-1]
    p = dict(p)
    p["gamma"] = 1.0 + 0.1 * jax.random.normal(k1, (1, c), jnp.float32)
    p["beta"] = 0.1 * jax.random.normal(k2, (1, c), jnp.float32)
    p["running_mean"] = 0.1 * jax.random.normal(k3, (1, c), jnp.float32)
    p["running_var"] = 1.0 + 0.5 * jax.random.uniform(k4, (1, c), jnp.float32)
    return p


def _nonlocal_ref(x_h, x_l, p):
    """Pure-JAX reference mirroring the PyTorch forward (eval-mode BN)."""
    g_x = x_l @ p["wg"] + p["bg"]
    theta = x_h @ p["wt"] + p["bt"]
    phi = x_l @ p["wp"] + p["bp"]
    energy = jnp.einsum("bnd,bmd->bnm", theta, phi)
    attn = energy / energy.shape[-1]
    y = jnp.einsum("bnm,bmd->bnd", attn, g_x)
    y = y @ p["ww"] + p["bw"]
    inv_std = 1.0 / jnp.sqrt(p["running_var"] + _BN_EPS)
    y = p["gamma"] * (y - p["running_mean"]) * inv_std + p["beta"]
    return y + x_h


def _mfa_ref(x, x0, cnl_p, pnl_p):
    return _nonlocal_ref(_nonlocal_ref(x, x0, cnl_p), x0, pnl_p)


# ----------------------------------------------------------------------------- demo / check
if __name__ == "__main__":
    B, N = 2, 16
    high_dim, low_dim, reduc_ratio = 32, 16, 2

    key = jax.random.PRNGKey(0)
    k_x, k_x0, k_cnl, k_pnl, k_bn1, k_bn2 = jax.random.split(key, 6)

    x = jax.random.normal(k_x, (B, N, high_dim), jnp.float32)
    x0 = jax.random.normal(k_x0, (B, N, high_dim), jnp.float32)

    cnl_params = init_nl_params(k_cnl, high_dim, low_dim)                  # CNL: low_dim
    pnl_params = init_nl_params(k_pnl, high_dim, low_dim // reduc_ratio)   # PNL: low_dim//2
    # non-zero BN params so the attention/projection math is actually validated
    cnl_params = _randomize_bn(k_bn1, cnl_params)
    pnl_params = _randomize_bn(k_bn2, pnl_params)

    ref = _mfa_ref(x, x0, cnl_params, pnl_params)

    # f32 path (bit-faithful to the PyTorch module)
    out = jax.block_until_ready(mfa_block(x, x0, cnl_params, pnl_params))
    np.testing.assert_allclose(np.asarray(out), np.asarray(ref), rtol=1e-5, atol=1e-5)

    # bf16 MXU-operand path (recommended on v6e/v7x), f32 accumulation
    out_bf16 = jax.block_until_ready(
        mfa_block(x, x0, cnl_params, pnl_params, compute_dtype=jnp.bfloat16))
    np.testing.assert_allclose(np.asarray(out_bf16), np.asarray(ref), rtol=2e-2, atol=2e-2)

    print("KERNEL_OK")
</pallas_src>

<mosaic_0001>
module attributes {stable_mosaic.version = 11 : i64} {
  func.func @_mfa_kernel(%arg0: i32, %arg1: memref<16x128xf32, #tpu.memory_space<vmem>>, %arg2: memref<16x128xf32, #tpu.memory_space<vmem>>, %arg3: memref<128x16xf32, #tpu.memory_space<vmem>>, %arg4: memref<1x16xf32, #tpu.memory_space<vmem>>, %arg5: memref<128x16xf32, #tpu.memory_space<vmem>>, %arg6: memref<1x16xf32, #tpu.memory_space<vmem>>, %arg7: memref<128x16xf32, #tpu.memory_space<vmem>>, %arg8: memref<1x16xf32, #tpu.memory_space<vmem>>, %arg9: memref<16x128xf32, #tpu.memory_space<vmem>>, %arg10: memref<1x128xf32, #tpu.memory_space<vmem>>, %arg11: memref<1x128xf32, #tpu.memory_space<vmem>>, %arg12: memref<1x128xf32, #tpu.memory_space<vmem>>, %arg13: memref<128x8xf32, #tpu.memory_space<vmem>>, %arg14: memref<1x8xf32, #tpu.memory_space<vmem>>, %arg15: memref<128x8xf32, #tpu.memory_space<vmem>>, %arg16: memref<1x8xf32, #tpu.memory_space<vmem>>, %arg17: memref<128x8xf32, #tpu.memory_space<vmem>>, %arg18: memref<1x8xf32, #tpu.memory_space<vmem>>, %arg19: memref<8x128xf32, #tpu.memory_space<vmem>>, %arg20: memref<1x128xf32, #tpu.memory_space<vmem>>, %arg21: memref<1x128xf32, #tpu.memory_space<vmem>>, %arg22: memref<1x128xf32, #tpu.memory_space<vmem>>, %arg23: memref<16x128xf32, #tpu.memory_space<vmem>>) attributes {dimension_semantics = [#tpu.dimension_semantics<parallel>], iteration_bounds = array<i64: 2>, scalar_prefetch = 0 : i64, scratch_operands = 0 : i64, tpu.core_type = #tpu.core_type<tc>, window_params = [{transform_indices = @transform_0, window_bounds = array<i64: 16, 128>}, {transform_indices = @transform_1, window_bounds = array<i64: 16, 128>}, {pipeline_mode = #tpu.pipeline_mode<synchronous>, transform_indices = @transform_2, window_bounds = array<i64: 128, 16>}, {pipeline_mode = #tpu.pipeline_mode<synchronous>, transform_indices = @transform_3, window_bounds = array<i64: 1, 16>}, {pipeline_mode = #tpu.pipeline_mode<synchronous>, transform_indices = @transform_4, window_bounds = array<i64: 128, 16>}, {pipeline_mode = #tpu.pipeline_mode<synchronous>, transform_indices = @transform_5, window_bounds = array<i64: 1, 16>}, {pipeline_mode = #tpu.pipeline_mode<synchronous>, transform_indices = @transform_6, window_bounds = array<i64: 128, 16>}, {pipeline_mode = #tpu.pipeline_mode<synchronous>, transform_indices = @transform_7, window_bounds = array<i64: 1, 16>}, {pipeline_mode = #tpu.pipeline_mode<synchronous>, transform_indices = @transform_8, window_bounds = array<i64: 16, 128>}, {pipeline_mode = #tpu.pipeline_mode<synchronous>, transform_indices = @transform_9, window_bounds = array<i64: 1, 128>}, {pipeline_mode = #tpu.pipeline_mode<synchronous>, transform_indices = @transform_10, window_bounds = array<i64: 1, 128>}, {pipeline_mode = #tpu.pipeline_mode<synchronous>, transform_indices = @transform_11, window_bounds = array<i64: 1, 128>}, {pipeline_mode = #tpu.pipeline_mode<synchronous>, transform_indices = @transform_12, window_bounds = array<i64: 128, 8>}, {pipeline_mode = #tpu.pipeline_mode<synchronous>, transform_indices = @transform_13, window_bounds = array<i64: 1, 8>}, {pipeline_mode = #tpu.pipeline_mode<synchronous>, transform_indices = @transform_14, window_bounds = array<i64: 128, 8>}, {pipeline_mode = #tpu.pipeline_mode<synchronous>, transform_indices = @transform_15, window_bounds = array<i64: 1, 8>}, {pipeline_mode = #tpu.pipeline_mode<synchronous>, transform_indices = @transform_16, window_bounds = array<i64: 128, 8>}, {pipeline_mode = #tpu.pipeline_mode<synchronous>, transform_indices = @transform_17, window_bounds = array<i64: 1, 8>}, {pipeline_mode = #tpu.pipeline_mode<synchronous>, transform_indices = @transform_18, window_bounds = array<i64: 8, 128>}, {pipeline_mode = #tpu.pipeline_mode<synchronous>, transform_indices = @transform_19, window_bounds = array<i64: 1, 128>}, {pipeline_mode = #tpu.pipeline_mode<synchronous>, transform_indices = @transform_20, window_bounds = array<i64: 1, 128>}, {pipeline_mode = #tpu.pipeline_mode<synchronous>, transform_indices = @transform_21, window_bounds = array<i64: 1, 128>}, {transform_indices = @transform_22, window_bounds = array<i64: 16, 128>}]} {
    %c0 = arith.constant 0 : index
    %c0_0 = arith.constant 0 : index
    %0 = vector.load %arg1[%c0, %c0_0] : memref<16x128xf32, #tpu.memory_space<vmem>>, vector<16x128xf32>
    %c0_1 = arith.constant 0 : index
    %c0_2 = arith.constant 0 : index
    %1 = vector.load %arg2[%c0_1, %c0_2] : memref<16x128xf32, #tpu.memory_space<vmem>>, vector<16x128xf32>
    %c0_3 = arith.constant 0 : index
    %c0_4 = arith.constant 0 : index
    %2 = vector.load %arg3[%c0_3, %c0_4] : memref<128x16xf32, #tpu.memory_space<vmem>>, vector<128x16xf32>
    %cst = arith.constant dense<0.000000e+00> : vector<16x16xf32>
    %3 = tpu.matmul %1, %2, %cst {dimension_numbers = #tpu.dot_dimension_numbers<[1], [0], [0], [1], [0, 0, 1, 1], [], []>} : vector<16x128xf32>, vector<128x16xf32>, vector<16x16xf32> -> vector<16x16xf32>
    %c0_5 = arith.constant 0 : index
    %c0_6 = arith.constant 0 : index
    %4 = vector.load %arg4[%c0_5, %c0_6] : memref<1x16xf32, #tpu.memory_space<vmem>>, vector<1x16xf32>
    %5 = vector.broadcast %4 : vector<1x16xf32> to vector<16x16xf32>
    %6 = arith.addf %3, %5 : vector<16x16xf32>
    %c0_7 = arith.constant 0 : index
    %c0_8 = arith.constant 0 : index
    %7 = vector.load %arg5[%c0_7, %c0_8] : memref<128x16xf32, #tpu.memory_space<vmem>>, vector<128x16xf32>
    %cst_9 = arith.constant dense<0.000000e+00> : vector<16x16xf32>
    %8 = tpu.matmul %0, %7, %cst_9 {dimension_numbers = #tpu.dot_dimension_numbers<[1], [0], [0], [1], [0, 0, 1, 1], [], []>} : vector<16x128xf32>, vector<128x16xf32>, vector<16x16xf32> -> vector<16x16xf32>
    %c0_10 = arith.constant 0 : index
    %c0_11 = arith.constant 0 : index
    %9 = vector.load %arg6[%c0_10, %c0_11] : memref<1x16xf32, #tpu.memory_space<vmem>>, vector<1x16xf32>
    %10 = vector.broadcast %9 : vector<1x16xf32> to vector<16x16xf32>
    %11 = arith.addf %8, %10 : vector<16x16xf32>
    %c0_12 = arith.constant 0 : index
    %c0_13 = arith.constant 0 : index
    %12 = vector.load %arg7[%c0_12, %c0_13] : memref<128x16xf32, #tpu.memory_space<vmem>>, vector<128x16xf32>
    %cst_14 = arith.constant dense<0.000000e+00> : vector<16x16xf32>
    %13 = tpu.matmul %1, %12, %cst_14 {dimension_numbers = #tpu.dot_dimension_numbers<[1], [0], [0], [1], [0, 0, 1, 1], [], []>} : vector<16x128xf32>, vector<128x16xf32>, vector<16x16xf32> -> vector<16x16xf32>
    %c0_15 = arith.constant 0 : index
    %c0_16 = arith.constant 0 : index
    %14 = vector.load %arg8[%c0_15, %c0_16] : memref<1x16xf32, #tpu.memory_space<vmem>>, vector<1x16xf32>
    %15 = vector.broadcast %14 : vector<1x16xf32> to vector<16x16xf32>
    %16 = arith.addf %13, %15 : vector<16x16xf32>
    %cst_17 = arith.constant dense<0.000000e+00> : vector<16x16xf32>
    %17 = tpu.matmul %11, %16, %cst_17 {dimension_numbers = #tpu.dot_dimension_numbers<[1], [1], [0], [0], [0, 0, 1, 0], [], []>} : vector<16x16xf32>, vector<16x16xf32>, vector<16x16xf32> -> vector<16x16xf32>
    %cst_18 = arith.constant dense<0.000000e+00> : vector<16x16xf32>
    %18 = tpu.matmul %17, %6, %cst_18 {dimension_numbers = #tpu.dot_dimension_numbers<[1], [0], [0], [1], [0, 0, 1, 1], [], []>} : vector<16x16xf32>, vector<16x16xf32>, vector<16x16xf32> -> vector<16x16xf32>
    %c0_19 = arith.constant 0 : index
    %c0_20 = arith.constant 0 : index
    %19 = vector.load %arg9[%c0_19, %c0_20] : memref<16x128xf32, #tpu.memory_space<vmem>>, vector<16x128xf32>
    %cst_21 = arith.constant dense<0.000000e+00> : vector<16x128xf32>
    %20 = tpu.matmul %18, %19, %cst_21 {dimension_numbers = #tpu.dot_dimension_numbers<[1], [0], [0], [1], [0, 0, 1, 1], [], []>} : vector<16x16xf32>, vector<16x128xf32>, vector<16x128xf32> -> vector<16x128xf32>
    %c0_22 = arith.constant 0 : index
    %c0_23 = arith.constant 0 : index
    %21 = vector.load %arg10[%c0_22, %c0_23] : memref<1x128xf32, #tpu.memory_space<vmem>>, vector<1x128xf32>
    %22 = vector.broadcast %21 : vector<1x128xf32> to vector<16x128xf32>
    %23 = arith.addf %20, %22 : vector<16x128xf32>
    %c0_24 = arith.constant 0 : index
    %c0_25 = arith.constant 0 : index
    %24 = vector.load %arg11[%c0_24, %c0_25] : memref<1x128xf32, #tpu.memory_space<vmem>>, vector<1x128xf32>
    %25 = vector.broadcast %24 : vector<1x128xf32> to vector<16x128xf32>
    %26 = arith.mulf %23, %25 : vector<16x128xf32>
    %c0_26 = arith.constant 0 : index
    %c0_27 = arith.constant 0 : index
    %27 = vector.load %arg12[%c0_26, %c0_27] : memref<1x128xf32, #tpu.memory_space<vmem>>, vector<1x128xf32>
    %28 = vector.broadcast %27 : vector<1x128xf32> to vector<16x128xf32>
    %29 = arith.addf %26, %28 : vector<16x128xf32>
    %30 = arith.addf %29, %0 : vector<16x128xf32>
    %c0_28 = arith.constant 0 : index
    %c0_29 = arith.constant 0 : index
    %31 = vector.load %arg13[%c0_28, %c0_29] : memref<128x8xf32, #tpu.memory_space<vmem>>, vector<128x8xf32>
    %cst_30 = arith.constant dense<0.000000e+00> : vector<16x8xf32>
    %32 = tpu.matmul %1, %31, %cst_30 {dimension_numbers = #tpu.dot_dimension_numbers<[1], [0], [0], [1], [0, 0, 1, 1], [], []>} : vector<16x128xf32>, vector<128x8xf32>, vector<16x8xf32> -> vector<16x8xf32>
    %c0_31 = arith.constant 0 : index
    %c0_32 = arith.constant 0 : index
    %33 = vector.load %arg14[%c0_31, %c0_32] : memref<1x8xf32, #tpu.memory_space<vmem>>, vector<1x8xf32>
    %34 = vector.broadcast %33 : vector<1x8xf32> to vector<16x8xf32>
    %35 = arith.addf %32, %34 : vector<16x8xf32>
    %c0_33 = arith.constant 0 : index
    %c0_34 = arith.constant 0 : index
    %36 = vector.load %arg15[%c0_33, %c0_34] : memref<128x8xf32, #tpu.memory_space<vmem>>, vector<128x8xf32>
    %cst_35 = arith.constant dense<0.000000e+00> : vector<16x8xf32>
    %37 = tpu.matmul %30, %36, %cst_35 {dimension_numbers = #tpu.dot_dimension_numbers<[1], [0], [0], [1], [0, 0, 1, 1], [], []>} : vector<16x128xf32>, vector<128x8xf32>, vector<16x8xf32> -> vector<16x8xf32>
    %c0_36 = arith.constant 0 : index
    %c0_37 = arith.constant 0 : index
    %38 = vector.load %arg16[%c0_36, %c0_37] : memref<1x8xf32, #tpu.memory_space<vmem>>, vector<1x8xf32>
    %39 = vector.broadcast %38 : vector<1x8xf32> to vector<16x8xf32>
    %40 = arith.addf %37, %39 : vector<16x8xf32>
    %c0_38 = arith.constant 0 : index
    %c0_39 = arith.constant 0 : index
    %41 = vector.load %arg17[%c0_38, %c0_39] : memref<128x8xf32, #tpu.memory_space<vmem>>, vector<128x8xf32>
    %cst_40 = arith.constant dense<0.000000e+00> : vector<16x8xf32>
    %42 = tpu.matmul %1, %41, %cst_40 {dimension_numbers = #tpu.dot_dimension_numbers<[1], [0], [0], [1], [0, 0, 1, 1], [], []>} : vector<16x128xf32>, vector<128x8xf32>, vector<16x8xf32> -> vector<16x8xf32>
    %c0_41 = arith.constant 0 : index
    %c0_42 = arith.constant 0 : index
    %43 = vector.load %arg18[%c0_41, %c0_42] : memref<1x8xf32, #tpu.memory_space<vmem>>, vector<1x8xf32>
    %44 = vector.broadcast %43 : vector<1x8xf32> to vector<16x8xf32>
    %45 = arith.addf %42, %44 : vector<16x8xf32>
    %cst_43 = arith.constant dense<0.000000e+00> : vector<16x16xf32>
    %46 = tpu.matmul %40, %45, %cst_43 {dimension_numbers = #tpu.dot_dimension_numbers<[1], [1], [0], [0], [0, 0, 1, 0], [], []>} : vector<16x8xf32>, vector<16x8xf32>, vector<16x16xf32> -> vector<16x16xf32>
    %cst_44 = arith.constant dense<0.000000e+00> : vector<16x8xf32>
    %47 = tpu.matmul %46, %35, %cst_44 {dimension_numbers = #tpu.dot_dimension_numbers<[1], [0], [0], [1], [0, 0, 1, 1], [], []>} : vector<16x16xf32>, vector<16x8xf32>, vector<16x8xf32> -> vector<16x8xf32>
    %c0_45 = arith.constant 0 : index
    %c0_46 = arith.constant 0 : index
    %48 = vector.load %arg19[%c0_45, %c0_46] : memref<8x128xf32, #tpu.memory_space<vmem>>, vector<8x128xf32>
    %cst_47 = arith.constant dense<0.000000e+00> : vector<16x128xf32>
    %49 = tpu.matmul %47, %48, %cst_47 {dimension_numbers = #tpu.dot_dimension_numbers<[1], [0], [0], [1], [0, 0, 1, 1], [], []>} : vector<16x8xf32>, vector<8x128xf32>, vector<16x128xf32> -> vector<16x128xf32>
    %c0_48 = arith.constant 0 : index
    %c0_49 = arith.constant 0 : index
    %50 = vector.load %arg20[%c0_48, %c0_49] : memref<1x128xf32, #tpu.memory_space<vmem>>, vector<1x128xf32>
    %51 = vector.broadcast %50 : vector<1x128xf32> to vector<16x128xf32>
    %52 = arith.addf %49, %51 : vector<16x128xf32>
    %c0_50 = arith.constant 0 : index
    %c0_51 = arith.constant 0 : index
    %53 = vector.load %arg21[%c0_50, %c0_51] : memref<1x128xf32, #tpu.memory_space<vmem>>, vector<1x128xf32>
    %54 = vector.broadcast %53 : vector<1x128xf32> to vector<16x128xf32>
    %55 = arith.mulf %52, %54 : vector<16x128xf32>
    %c0_52 = arith.constant 0 : index
    %c0_53 = arith.constant 0 : index
    %56 = vector.load %arg22[%c0_52, %c0_53] : memref<1x128xf32, #tpu.memory_space<vmem>>, vector<1x128xf32>
    %57 = vector.broadcast %56 : vector<1x128xf32> to vector<16x128xf32>
    %58 = arith.addf %55, %57 : vector<16x128xf32>
    %59 = arith.addf %58, %30 : vector<16x128xf32>
    %c0_54 = arith.constant 0 : index
    %c0_55 = arith.constant 0 : index
    %60 = vector.load %arg23[%c0_54, %c0_55] : memref<16x128xf32, #tpu.memory_space<vmem>>, vector<16x128xf32>
    tpu.vector_store %arg23[%c0_54, %c0_55], %59 {strides = array<i32>} : memref<16x128xf32, #tpu.memory_space<vmem>>, vector<16x128xf32>,
    return
  }
  func.func @transform_0(%arg0: i32) -> (i32, i32) {
    %c0_i32 = arith.constant 0 : i32
    %c0_i32_0 = arith.constant 0 : i32
    return %arg0, %c0_i32 : i32, i32
  }
  func.func @transform_1(%arg0: i32) -> (i32, i32) {
    %c0_i32 = arith.constant 0 : i32
    %c0_i32_0 = arith.constant 0 : i32
    return %arg0, %c0_i32 : i32, i32
  }
  func.func @transform_2(%arg0: i32) -> (i32, i32) {
    %c0_i32 = arith.constant 0 : i32
    %c0_i32_0 = arith.constant 0 : i32
    %c0_i32_1 = arith.constant 0 : i32
    return %c0_i32, %c0_i32_0 : i32, i32
  }
  func.func @transform_3(%arg0: i32) -> (i32, i32) {
    %c0_i32 = arith.constant 0 : i32
    %c0_i32_0 = arith.constant 0 : i32
    %c0_i32_1 = arith.constant 0 : i32
    return %c0_i32, %c0_i32_0 : i32, i32
  }
  func.func @transform_4(%arg0: i32) -> (i32, i32) {
    %c0_i32 = arith.constant 0 : i32
    %c0_i32_0 = arith.constant 0 : i32
    %c0_i32_1 = arith.constant 0 : i32
    return %c0_i32, %c0_i32_0 : i32, i32
  }
  func.func @transform_5(%arg0: i32) -> (i32, i32) {
    %c0_i32 = arith.constant 0 : i32
    %c0_i32_0 = arith.constant 0 : i32
    %c0_i32_1 = arith.constant 0 : i32
    return %c0_i32, %c0_i32_0 : i32, i32
  }
  func.func @transform_6(%arg0: i32) -> (i32, i32) {
    %c0_i32 = arith.constant 0 : i32
    %c0_i32_0 = arith.constant 0 : i32
    %c0_i32_1 = arith.constant 0 : i32
    return %c0_i32, %c0_i32_0 : i32, i32
  }
  func.func @transform_7(%arg0: i32) -> (i32, i32) {
    %c0_i32 = arith.constant 0 : i32
    %c0_i32_0 = arith.constant 0 : i32
    %c0_i32_1 = arith.constant 0 : i32
    return %c0_i32, %c0_i32_0 : i32, i32
  }
  func.func @transform_8(%arg0: i32) -> (i32, i32) {
    %c0_i32 = arith.constant 0 : i32
    %c0_i32_0 = arith.constant 0 : i32
    %c0_i32_1 = arith.constant 0 : i32
    return %c0_i32, %c0_i32_0 : i32, i32
  }
  func.func @transform_9(%arg0: i32) -> (i32, i32) {
    %c0_i32 = arith.constant 0 : i32
    %c0_i32_0 = arith.constant 0 : i32
    %c0_i32_1 = arith.constant 0 : i32
    return %c0_i32, %c0_i32_0 : i32, i32
  }
  func.func @transform_10(%arg0: i32) -> (i32, i32) {
    %c0_i32 = arith.constant 0 : i32
    %c0_i32_0 = arith.constant 0 : i32
    %c0_i32_1 = arith.constant 0 : i32
    return %c0_i32, %c0_i32_0 : i32, i32
  }
  func.func @transform_11(%arg0: i32) -> (i32, i32) {
    %c0_i32 = arith.constant 0 : i32
    %c0_i32_0 = arith.constant 0 : i32
    %c0_i32_1 = arith.constant 0 : i32
    return %c0_i32, %c0_i32_0 : i32, i32
  }
  func.func @transform_12(%arg0: i32) -> (i32, i32) {
    %c0_i32 = arith.constant 0 : i32
    %c0_i32_0 = arith.constant 0 : i32
    %c0_i32_1 = arith.constant 0 : i32
    return %c0_i32, %c0_i32_0 : i32, i32
  }
  func.func @transform_13(%arg0: i32) -> (i32, i32) {
    %c0_i32 = arith.constant 0 : i32
    %c0_i32_0 = arith.constant 0 : i32
    %c0_i32_1 = arith.constant 0 : i32
    return %c0_i32, %c0_i32_0 : i32, i32
  }
  func.func @transform_14(%arg0: i32) -> (i32, i32) {
    %c0_i32 = arith.constant 0 : i32
    %c0_i32_0 = arith.constant 0 : i32
    %c0_i32_1 = arith.constant 0 : i32
    return %c0_i32, %c0_i32_0 : i32, i32
  }
  func.func @transform_15(%arg0: i32) -> (i32, i32) {
    %c0_i32 = arith.constant 0 : i32
    %c0_i32_0 = arith.constant 0 : i32
    %c0_i32_1 = arith.constant 0 : i32
    return %c0_i32, %c0_i32_0 : i32, i32
  }
  func.func @transform_16(%arg0: i32) -> (i32, i32) {
    %c0_i32 = arith.constant 0 : i32
    %c0_i32_0 = arith.constant 0 : i32
    %c0_i32_1 = arith.constant 0 : i32
    return %c0_i32, %c0_i32_0 : i32, i32
  }
  func.func @transform_17(%arg0: i32) -> (i32, i32) {
    %c0_i32 = arith.constant 0 : i32
    %c0_i32_0 = arith.constant 0 : i32
    %c0_i32_1 = arith.constant 0 : i32
    return %c0_i32, %c0_i32_0 : i32, i32
  }
  func.func @transform_18(%arg0: i32) -> (i32, i32) {
    %c0_i32 = arith.constant 0 : i32
    %c0_i32_0 = arith.constant 0 : i32
    %c0_i32_1 = arith.constant 0 : i32
    return %c0_i32, %c0_i32_0 : i32, i32
  }
  func.func @transform_19(%arg0: i32) -> (i32, i32) {
    %c0_i32 = arith.constant 0 : i32
    %c0_i32_0 = arith.constant 0 : i32
    %c0_i32_1 = arith.constant 0 : i32
    return %c0_i32, %c0_i32_0 : i32, i32
  }
  func.func @transform_20(%arg0: i32) -> (i32, i32) {
    %c0_i32 = arith.constant 0 : i32
    %c0_i32_0 = arith.constant 0 : i32
    %c0_i32_1 = arith.constant 0 : i32
    return %c0_i32, %c0_i32_0 : i32, i32
  }
  func.func @transform_21(%arg0: i32) -> (i32, i32) {
    %c0_i32 = arith.constant 0 : i32
    %c0_i32_0 = arith.constant 0 : i32
    %c0_i32_1 = arith.constant 0 : i32
    return %c0_i32, %c0_i32_0 : i32, i32
  }
  func.func @transform_22(%arg0: i32) -> (i32, i32) {
    %c0_i32 = arith.constant 0 : i32
    %c0_i32_0 = arith.constant 0 : i32
    return %arg0, %c0_i32 : i32, i32
  }
}

</mosaic_0001>

<llo_original>
// kernel: tpu_custom_call.1
$region0: #{tpu_custom_call.1}
  #allocation0 [shape = 'u32[]', space=smem, size = 0x4, offset = 0x4, fixed_abs, tag = 'smem constant byte address 0x4 - core index']
  #allocation1 [shape = 'u32[144,128]{1,0:T(1,128)}', space=vmem, size = 0x12000, scoped, tag = 'internal scratch']
  %s0 = inlined_call_operand.vmem [shape: f32[32,128], index: 0, kind: input, shape index: {}]
  %s1 = inlined_call_operand.vmem [shape: f32[32,128], index: 1, kind: input, shape index: {}]
  %s2 = inlined_call_operand.vmem [shape: f32[128,16], index: 2, kind: input, shape index: {}]
  %s3 = inlined_call_operand.vmem [shape: f32[1,16], index: 3, kind: input, shape index: {}]
  %s4 = inlined_call_operand.vmem [shape: f32[128,16], index: 4, kind: input, shape index: {}]
  %s5 = inlined_call_operand.vmem [shape: f32[1,16], index: 5, kind: input, shape index: {}]
  %s6 = inlined_call_operand.vmem [shape: f32[128,16], index: 6, kind: input, shape index: {}]
  %s7 = inlined_call_operand.vmem [shape: f32[1,16], index: 7, kind: input, shape index: {}]
  %s8 = inlined_call_operand.vmem [shape: f32[16,128], index: 8, kind: input, shape index: {}]
  %s9 = inlined_call_operand.vmem [shape: f32[1,128], index: 9, kind: input, shape index: {}]
  %s10 = inlined_call_operand.vmem [shape: f32[1,128], index: 10, kind: input, shape index: {}]
  %s11 = inlined_call_operand.vmem [shape: f32[1,128], index: 11, kind: input, shape index: {}]
  %s12 = inlined_call_operand.vmem [shape: f32[128,8], index: 12, kind: input, shape index: {}]
  %s13 = inlined_call_operand.vmem [shape: f32[1,8], index: 13, kind: input, shape index: {}]
  %s14 = inlined_call_operand.vmem [shape: f32[128,8], index: 14, kind: input, shape index: {}]
  %s15 = inlined_call_operand.vmem [shape: f32[1,8], index: 15, kind: input, shape index: {}]
  %s16 = inlined_call_operand.vmem [shape: f32[128,8], index: 16, kind: input, shape index: {}]
  %s17 = inlined_call_operand.vmem [shape: f32[1,8], index: 17, kind: input, shape index: {}]
  %s18 = inlined_call_operand.vmem [shape: f32[8,128], index: 18, kind: input, shape index: {}]
  %s19 = inlined_call_operand.vmem [shape: f32[1,128], index: 19, kind: input, shape index: {}]
  %s20 = inlined_call_operand.vmem [shape: f32[1,128], index: 20, kind: input, shape index: {}]
  %s21 = inlined_call_operand.vmem [shape: f32[1,128], index: 21, kind: input, shape index: {}]
  %s22 = inlined_call_operand.hbm [shape: f32[32,128], index: 22, kind: output, shape index: {}]
  %s23 = sld [smem:[#allocation0]]
  $region121: #{tpu_custom_call.1} parent=0
    _
  %s25 = ssub.s32 1, %s23
  %s26 = scalar_select 0, %s25, %s23
  $region1: #{tpu_custom_call.1} parent=0
    #allocation2 [shape = 'u8[16384]{0}', space=vmem, size = 0x4000, scoped, tag = 'output window, operand 0']
    #allocation3 [shape = 's32[2]{0}', space=sflag, size = 0x8, scoped, tag = 'scoped memory for tpu_custom_call.1']
    %27 = vsyncpa [#allocation3], 0
    %s28 = scalar_lea.sflag [#allocation3], 1
    %29 = vsyncpa %s28, 0
    loop: start=0, step=1, limit=4
    $region2: #{tpu_custom_call.1} parent=1 // loop_pre_header
      _
    $region3: #{tpu_custom_call.1} parent=1 // loop_header
      %s31 = sphi 0, %s35
      %p32 = scmp.ge.s32.totalorder %s31, 4
      %s41 = sphi 0, %s43
      %s44 = sphi 0, %s41
      %s45 = sphi 0, %s44
      %s61 = sphi 0, %s45
      %s67 = sphi 0, %s69
      %s70 = sphi 0, %s67
      %s71 = sphi 0, %s70
      %s87 = sphi 0, %s71
      %s91 = sphi 0, %s91
      %s93 = sphi 0, %s91
      %s94 = sphi 0, %s93
      %s108 = sphi 0, %s94
      %s112 = sphi 0, %s112
      %s114 = sphi 0, %s112
      %s115 = sphi 0, %s114
      %s129 = sphi 0, %s115
      %s133 = sphi 0, %s133
      %s135 = sphi 0, %s133
      %s136 = sphi 0, %s135
      %s150 = sphi 0, %s136
      %s154 = sphi 0, %s154
      %s156 = sphi 0, %s154
      %s157 = sphi 0, %s156
      %s171 = sphi 0, %s157
      %s175 = sphi 0, %s175
      %s177 = sphi 0, %s175
      %s178 = sphi 0, %s177
      %s192 = sphi 0, %s178
      %s196 = sphi 0, %s196
      %s198 = sphi 0, %s196
      %s199 = sphi 0, %s198
      %s213 = sphi 0, %s199
      %s217 = sphi 0, %s217
      %s219 = sphi 0, %s217
      %s220 = sphi 0, %s219
      %s234 = sphi 0, %s220
      %s238 = sphi 0, %s238
      %s240 = sphi 0, %s238
      %s241 = sphi 0, %s240
      %s255 = sphi 0, %s241
      %s259 = sphi 0, %s259
      %s261 = sphi 0, %s259
      %s262 = sphi 0, %s261
      %s276 = sphi 0, %s262
      %s280 = sphi 0, %s280
      %s282 = sphi 0, %s280
      %s283 = sphi 0, %s282
      %s297 = sphi 0, %s283
      %s301 = sphi 0, %s301
      %s303 = sphi 0, %s301
      %s304 = sphi 0, %s303
      %s318 = sphi 0, %s304
      %s322 = sphi 0, %s322
      %s324 = sphi 0, %s322
      %s325 = sphi 0, %s324
      %s339 = sphi 0, %s325
      %s343 = sphi 0, %s343
      %s345 = sphi 0, %s343
      %s346 = sphi 0, %s345
      %s360 = sphi 0, %s346
      %s364 = sphi 0, %s364
      %s366 = sphi 0, %s364
      %s367 = sphi 0, %s366
      %s381 = sphi 0, %s367
      %s385 = sphi 0, %s385
      %s387 = sphi 0, %s385
      %s388 = sphi 0, %s387
      %s402 = sphi 0, %s388
      %s406 = sphi 0, %s406
      %s408 = sphi 0, %s406
      %s409 = sphi 0, %s408
      %s423 = sphi 0, %s409
      %s427 = sphi 0, %s427
      %s429 = sphi 0, %s427
      %s430 = sphi 0, %s429
      %s444 = sphi 0, %s430
      %s448 = sphi 0, %s448
      %s450 = sphi 0, %s448
      %s451 = sphi 0, %s450
      %s465 = sphi 0, %s451
      %s469 = sphi 0, %s469
      %s471 = sphi 0, %s469
      %s472 = sphi 0, %s471
      %s486 = sphi 0, %s472
      %s490 = sphi 0, %s490
      %s492 = sphi 0, %s490
      %s493 = sphi 0, %s492
      %s507 = sphi 0, %s493
      %s513 = sphi 0, %s515
      %s516 = sphi 0, %s513
      %s517 = sphi 0, %s516
      %s533 = sphi 0, %s517
    $region4: #{tpu_custom_call.1} parent=1 // loop_header_branch
      %34 = sbr.rel (%p32) target = $region8
    $region5: #{tpu_custom_call.1} parent=1 // loop_body
      %s36 = ssub.s32 %s31, 1
      %s37 = ssub.s32 %s31, 2
      %s38 = sadd.s32 %s31, 1
      %s39 = ssub.s32 %s31, %s38
      %p40 = scmp.eq.s32.totalorder %s39, 0
      %s42 = sadd.s32 %s41, 1
      %s43 = scalar_select %p40, %s41, %s42
      %p46 = pneg %p40
      %p47 = scmp.eq.s32.totalorder %s31, 1
      %p48 = por %p46, %p47
      %p49 = scmp.ne.s32.totalorder %s41, %s44
      %p50 = scmp.eq.s32.totalorder %s31, 0
      %p51 = por %p49, %p50
      %p52 = scmp.ne.s32.totalorder %s41, %s44
      %p53 = scmp.eq.s32.totalorder %s36, 1
      %p54 = por %p52, %p53
      %p55 = scmp.ne.s32.totalorder %s44, %s45
      %p56 = scmp.eq.s32.totalorder %s36, 0
      %p57 = por %p55, %p56
      %p58 = scmp.ne.s32.totalorder %s44, %s45
      %p59 = scmp.eq.s32.totalorder %s37, 1
      %p60 = por %p58, %p59
      %p62 = scmp.ne.s32.totalorder %s45, %s61
      %p63 = scmp.eq.s32.totalorder %s37, 0
      %p64 = por %p62, %p63
      %s65 = ssub.s32 %s31, %s38
      %p66 = scmp.eq.s32.totalorder %s65, 0
      %s68 = sadd.s32 %s67, 1
      %s69 = scalar_select %p66, %s67, %s68
      %p72 = pneg %p66
      %p73 = scmp.eq.s32.totalorder %s31, 1
      %p74 = por %p72, %p73
      %p75 = scmp.ne.s32.totalorder %s67, %s70
      %p76 = scmp.eq.s32.totalorder %s31, 0
      %p77 = por %p75, %p76
      %p78 = scmp.ne.s32.totalorder %s67, %s70
      %p79 = scmp.eq.s32.totalorder %s36, 1
      %p80 = por %p78, %p79
      %p81 = scmp.ne.s32.totalorder %s70, %s71
      %p82 = scmp.eq.s32.totalorder %s36, 0
      %p83 = por %p81, %p82
      %p84 = scmp.ne.s32.totalorder %s70, %s71
      %p85 = scmp.eq.s32.totalorder %s37, 1
      %p86 = por %p84, %p85
      %p88 = scmp.ne.s32.totalorder %s71, %s87
      %p89 = scmp.eq.s32.totalorder %s37, 0
      %p90 = por %p88, %p89
      %s92 = sadd.s32 %s91, 1
      %p95 = scmp.eq.s32.totalorder %s31, 1
      %p96 = scmp.ne.s32.totalorder %s91, %s93
      %p97 = scmp.eq.s32.totalorder %s31, 0
      %p98 = por %p96, %p97
      %p99 = scmp.ne.s32.totalorder %s91, %s93
      %p100 = scmp.eq.s32.totalorder %s36, 1
      %p101 = por %p99, %p100
      %p102 = scmp.ne.s32.totalorder %s93, %s94
      %p103 = scmp.eq.s32.totalorder %s36, 0
      %p104 = por %p102, %p103
      %p105 = scmp.ne.s32.totalorder %s93, %s94
      %p106 = scmp.eq.s32.totalorder %s37, 1
      %p107 = por %p105, %p106
      %p109 = scmp.ne.s32.totalorder %s94, %s108
      %p110 = scmp.eq.s32.totalorder %s37, 0
      %p111 = por %p109, %p110
      %s113 = sadd.s32 %s112, 1
      %p116 = scmp.eq.s32.totalorder %s31, 1
      %p117 = scmp.ne.s32.totalorder %s112, %s114
      %p118 = scmp.eq.s32.totalorder %s31, 0
      %p119 = por %p117, %p118
      %p120 = scmp.ne.s32.totalorder %s112, %s114
      %p121 = scmp.eq.s32.totalorder %s36, 1
      %p122 = por %p120, %p121
      %p123 = scmp.ne.s32.totalorder %s114, %s115
      %p124 = scmp.eq.s32.totalorder %s36, 0
      %p125 = por %p123, %p124
      %p126 = scmp.ne.s32.totalorder %s114, %s115
      %p127 = scmp.eq.s32.totalorder %s37, 1
      %p128 = por %p126, %p127
      %p130 = scmp.ne.s32.totalorder %s115, %s129
      %p131 = scmp.eq.s32.totalorder %s37, 0
      %p132 = por %p130, %p131
      %s134 = sadd.s32 %s133, 1
      %p137 = scmp.eq.s32.totalorder %s31, 1
      %p138 = scmp.ne.s32.totalorder %s133, %s135
      %p139 = scmp.eq.s32.totalorder %s31, 0
      %p140 = por %p138, %p139
      %p141 = scmp.ne.s32.totalorder %s133, %s135
      %p142 = scmp.eq.s32.totalorder %s36, 1
      %p143 = por %p141, %p142
      %p144 = scmp.ne.s32.totalorder %s135, %s136
      %p145 = scmp.eq.s32.totalorder %s36, 0
      %p146 = por %p144, %p145
      %p147 = scmp.ne.s32.totalorder %s135, %s136
      %p148 = scmp.eq.s32.totalorder %s37, 1
      %p149 = por %p147, %p148
      %p151 = scmp.ne.s32.totalorder %s136, %s150
      %p152 = scmp.eq.s32.totalorder %s37, 0
      %p153 = por %p151, %p152
      %s155 = sadd.s32 %s154, 1
      %p158 = scmp.eq.s32.totalorder %s31, 1
      %p159 = scmp.ne.s32.totalorder %s154, %s156
      %p160 = scmp.eq.s32.totalorder %s31, 0
      %p161 = por %p159, %p160
      %p162 = scmp.ne.s32.totalorder %s154, %s156
      %p163 = scmp.eq.s32.totalorder %s36, 1
      %p164 = por %p162, %p163
      %p165 = scmp.ne.s32.totalorder %s156, %s157
      %p166 = scmp.eq.s32.totalorder %s36, 0
      %p167 = por %p165, %p166
      %p168 = scmp.ne.s32.totalorder %s156, %s157
      %p169 = scmp.eq.s32.totalorder %s37, 1
      %p170 = por %p168, %p169
      %p172 = scmp.ne.s32.totalorder %s157, %s171
      %p173 = scmp.eq.s32.totalorder %s37, 0
      %p174 = por %p172, %p173
      %s176 = sadd.s32 %s175, 1
      %p179 = scmp.eq.s32.totalorder %s31, 1
      %p180 = scmp.ne.s32.totalorder %s175, %s177
      %p181 = scmp.eq.s32.totalorder %s31, 0
      %p182 = por %p180, %p181
      %p183 = scmp.ne.s32.totalorder %s175, %s177
      %p184 = scmp.eq.s32.totalorder %s36, 1
      %p185 = por %p183, %p184
      %p186 = scmp.ne.s32.totalorder %s177, %s178
      %p187 = scmp.eq.s32.totalorder %s36, 0
      %p188 = por %p186, %p187
      %p189 = scmp.ne.s32.totalorder %s177, %s178
      %p190 = scmp.eq.s32.totalorder %s37, 1
      %p191 = por %p189, %p190
      %p193 = scmp.ne.s32.totalorder %s178, %s192
      %p194 = scmp.eq.s32.totalorder %s37, 0
      %p195 = por %p193, %p194
      %s197 = sadd.s32 %s196, 1
      %p200 = scmp.eq.s32.totalorder %s31, 1
      %p201 = scmp.ne.s32.totalorder %s196, %s198
      %p202 = scmp.eq.s32.totalorder %s31, 0
      %p203 = por %p201, %p202
      %p204 = scmp.ne.s32.totalorder %s196, %s198
      %p205 = scmp.eq.s32.totalorder %s36, 1
      %p206 = por %p204, %p205
      %p207 = scmp.ne.s32.totalorder %s198, %s199
      %p208 = scmp.eq.s32.totalorder %s36, 0
      %p209 = por %p207, %p208
      %p210 = scmp.ne.s32.totalorder %s198, %s199
      %p211 = scmp.eq.s32.totalorder %s37, 1
      %p212 = por %p210, %p211
      %p214 = scmp.ne.s32.totalorder %s199, %s213
      %p215 = scmp.eq.s32.totalorder %s37, 0
      %p216 = por %p214, %p215
      %s218 = sadd.s32 %s217, 1
      %p221 = scmp.eq.s32.totalorder %s31, 1
      %p222 = scmp.ne.s32.totalorder %s217, %s219
      %p223 = scmp.eq.s32.totalorder %s31, 0
      %p224 = por %p222, %p223
      %p225 = scmp.ne.s32.totalorder %s217, %s219
      %p226 = scmp.eq.s32.totalorder %s36, 1
      %p227 = por %p225, %p226
      %p228 = scmp.ne.s32.totalorder %s219, %s220
      %p229 = scmp.eq.s32.totalorder %s36, 0
      %p230 = por %p228, %p229
      %p231 = scmp.ne.s32.totalorder %s219, %s220
      %p232 = scmp.eq.s32.totalorder %s37, 1
      %p233 = por %p231, %p232
      %p235 = scmp.ne.s32.totalorder %s220, %s234
      %p236 = scmp.eq.s32.totalorder %s37, 0
      %p237 = por %p235, %p236
      %s239 = sadd.s32 %s238, 1
      %p242 = scmp.eq.s32.totalorder %s31, 1
      %p243 = scmp.ne.s32.totalorder %s238, %s240
      %p244 = scmp.eq.s32.totalorder %s31, 0
      %p245 = por %p243, %p244
      %p246 = scmp.ne.s32.totalorder %s238, %s240
      %p247 = scmp.eq.s32.totalorder %s36, 1
      %p248 = por %p246, %p247
      %p249 = scmp.ne.s32.totalorder %s240, %s241
      %p250 = scmp.eq.s32.totalorder %s36, 0
      %p251 = por %p249, %p250
      %p252 = scmp.ne.s32.totalorder %s240, %s241
      %p253 = scmp.eq.s32.totalorder %s37, 1
      %p254 = por %p252, %p253
      %p256 = scmp.ne.s32.totalorder %s241, %s255
      %p257 = scmp.eq.s32.totalorder %s37, 0
      %p258 = por %p256, %p257
      %s260 = sadd.s32 %s259, 1
      %p263 = scmp.eq.s32.totalorder %s31, 1
      %p264 = scmp.ne.s32.totalorder %s259, %s261
      %p265 = scmp.eq.s32.totalorder %s31, 0
      %p266 = por %p264, %p265
      %p267 = scmp.ne.s32.totalorder %s259, %s261
      %p268 = scmp.eq.s32.totalorder %s36, 1
      %p269 = por %p267, %p268
      %p270 = scmp.ne.s32.totalorder %s261, %s262
      %p271 = scmp.eq.s32.totalorder %s36, 0
      %p272 = por %p270, %p271
      %p273 = scmp.ne.s32.totalorder %s261, %s262
      %p274 = scmp.eq.s32.totalorder %s37, 1
      %p275 = por %p273, %p274
      %p277 = scmp.ne.s32.totalorder %s262, %s276
      %p278 = scmp.eq.s32.totalorder %s37, 0
      %p279 = por %p277, %p278
      %s281 = sadd.s32 %s280, 1
      %p284 = scmp.eq.s32.totalorder %s31, 1
      %p285 = scmp.ne.s32.totalorder %s280, %s282
      %p286 = scmp.eq.s32.totalorder %s31, 0
      %p287 = por %p285, %p286
      %p288 = scmp.ne.s32.totalorder %s280, %s282
      %p289 = scmp.eq.s32.totalorder %s36, 1
      %p290 = por %p288, %p289
      %p291 = scmp.ne.s32.totalorder %s282, %s283
      %p292 = scmp.eq.s32.totalorder %s36, 0
      %p293 = por %p291, %p292
      %p294 = scmp.ne.s32.totalorder %s282, %s283
      %p295 = scmp.eq.s32.totalorder %s37, 1
      %p296 = por %p294, %p295
      %p298 = scmp.ne.s32.totalorder %s283, %s297
      %p299 = scmp.eq.s32.totalorder %s37, 0
      %p300 = por %p298, %p299
      %s302 = sadd.s32 %s301, 1
      %p305 = scmp.eq.s32.totalorder %s31, 1
      %p306 = scmp.ne.s32.totalorder %s301, %s303
      %p307 = scmp.eq.s32.totalorder %s31, 0
      %p308 = por %p306, %p307
      %p309 = scmp.ne.s32.totalorder %s301, %s303
      %p310 = scmp.eq.s32.totalorder %s36, 1
      %p311 = por %p309, %p310
      %p312 = scmp.ne.s32.totalorder %s303, %s304
      %p313 = scmp.eq.s32.totalorder %s36, 0
      %p314 = por %p312, %p313
      %p315 = scmp.ne.s32.totalorder %s303, %s304
      %p316 = scmp.eq.s32.totalorder %s37, 1
      %p317 = por %p315, %p316
      %p319 = scmp.ne.s32.totalorder %s304, %s318
      %p320 = scmp.eq.s32.totalorder %s37, 0
      %p321 = por %p319, %p320
      %s323 = sadd.s32 %s322, 1
      %p326 = scmp.eq.s32.totalorder %s31, 1
      %p327 = scmp.ne.s32.totalorder %s322, %s324
      %p328 = scmp.eq.s32.totalorder %s31, 0
      %p329 = por %p327, %p328
      %p330 = scmp.ne.s32.totalorder %s322, %s324
      %p331 = scmp.eq.s32.totalorder %s36, 1
      %p332 = por %p330, %p331
      %p333 = scmp.ne.s32.totalorder %s324, %s325
      %p334 = scmp.eq.s32.totalorder %s36, 0
      %p335 = por %p333, %p334
      %p336 = scmp.ne.s32.totalorder %s324, %s325
      %p337 = scmp.eq.s32.totalorder %s37, 1
      %p338 = por %p336, %p337
      %p340 = scmp.ne.s32.totalorder %s325, %s339
      %p341 = scmp.eq.s32.totalorder %s37, 0
      %p342 = por %p340, %p341
      %s344 = sadd.s32 %s343, 1
      %p347 = scmp.eq.s32.totalorder %s31, 1
      %p348 = scmp.ne.s32.totalorder %s343, %s345
      %p349 = scmp.eq.s32.totalorder %s31, 0
      %p350 = por %p348, %p349
      %p351 = scmp.ne.s32.totalorder %s343, %s345
      %p352 = scmp.eq.s32.totalorder %s36, 1
      %p353 = por %p351, %p352
      %p354 = scmp.ne.s32.totalorder %s345, %s346
      %p355 = scmp.eq.s32.totalorder %s36, 0
      %p356 = por %p354, %p355
      %p357 = scmp.ne.s32.totalorder %s345, %s346
      %p358 = scmp.eq.s32.totalorder %s37, 1
      %p359 = por %p357, %p358
      %p361 = scmp.ne.s32.totalorder %s346, %s360
      %p362 = scmp.eq.s32.totalorder %s37, 0
      %p363 = por %p361, %p362
      %s365 = sadd.s32 %s364, 1
      %p368 = scmp.eq.s32.totalorder %s31, 1
      %p369 = scmp.ne.s32.totalorder %s364, %s366
      %p370 = scmp.eq.s32.totalorder %s31, 0
      %p371 = por %p369, %p370
      %p372 = scmp.ne.s32.totalorder %s364, %s366
      %p373 = scmp.eq.s32.totalorder %s36, 1
      %p374 = por %p372, %p373
      %p375 = scmp.ne.s32.totalorder %s366, %s367
      %p376 = scmp.eq.s32.totalorder %s36, 0
      %p377 = por %p375, %p376
      %p378 = scmp.ne.s32.totalorder %s366, %s367
      %p379 = scmp.eq.s32.totalorder %s37, 1
      %p380 = por %p378, %p379
      %p382 = scmp.ne.s32.totalorder %s367, %s381
      %p383 = scmp.eq.s32.totalorder %s37, 0
      %p384 = por %p382, %p383
      %s386 = sadd.s32 %s385, 1
      %p389 = scmp.eq.s32.totalorder %s31, 1
      %p390 = scmp.ne.s32.totalorder %s385, %s387
      %p391 = scmp.eq.s32.totalorder %s31, 0
      %p392 = por %p390, %p391
      %p393 = scmp.ne.s32.totalorder %s385, %s387
      %p394 = scmp.eq.s32.totalorder %s36, 1
      %p395 = por %p393, %p394
      %p396 = scmp.ne.s32.totalorder %s387, %s388
      %p397 = scmp.eq.s32.totalorder %s36, 0
      %p398 = por %p396, %p397
      %p399 = scmp.ne.s32.totalorder %s387, %s388
      %p400 = scmp.eq.s32.totalorder %s37, 1
      %p401 = por %p399, %p400
      %p403 = scmp.ne.s32.totalorder %s388, %s402
      %p404 = scmp.eq.s32.totalorder %s37, 0
      %p405 = por %p403, %p404
      %s407 = sadd.s32 %s406, 1
      %p410 = scmp.eq.s32.totalorder %s31, 1
      %p411 = scmp.ne.s32.totalorder %s406, %s408
      %p412 = scmp.eq.s32.totalorder %s31, 0
      %p413 = por %p411, %p412
      %p414 = scmp.ne.s32.totalorder %s406, %s408
      %p415 = scmp.eq.s32.totalorder %s36, 1
      %p416 = por %p414, %p415
      %p417 = scmp.ne.s32.totalorder %s408, %s409
      %p418 = scmp.eq.s32.totalorder %s36, 0
      %p419 = por %p417, %p418
      %p420 = scmp.ne.s32.totalorder %s408, %s409
      %p421 = scmp.eq.s32.totalorder %s37, 1
      %p422 = por %p420, %p421
      %p424 = scmp.ne.s32.totalorder %s409, %s423
      %p425 = scmp.eq.s32.totalorder %s37, 0
      %p426 = por %p424, %p425
      %s428 = sadd.s32 %s427, 1
      %p431 = scmp.eq.s32.totalorder %s31, 1
      %p432 = scmp.ne.s32.totalorder %s427, %s429
      %p433 = scmp.eq.s32.totalorder %s31, 0
      %p434 = por %p432, %p433
      %p435 = scmp.ne.s32.totalorder %s427, %s429
      %p436 = scmp.eq.s32.totalorder %s36, 1
      %p437 = por %p435, %p436
      %p438 = scmp.ne.s32.totalorder %s429, %s430
      %p439 = scmp.eq.s32.totalorder %s36, 0
      %p440 = por %p438, %p439
      %p441 = scmp.ne.s32.totalorder %s429, %s430
      %p442 = scmp.eq.s32.totalorder %s37, 1
      %p443 = por %p441, %p442
      %p445 = scmp.ne.s32.totalorder %s430, %s444
      %p446 = scmp.eq.s32.totalorder %s37, 0
      %p447 = por %p445, %p446
      %s449 = sadd.s32 %s448, 1
      %p452 = scmp.eq.s32.totalorder %s31, 1
      %p453 = scmp.ne.s32.totalorder %s448, %s450
      %p454 = scmp.eq.s32.totalorder %s31, 0
      %p455 = por %p453, %p454
      %p456 = scmp.ne.s32.totalorder %s448, %s450
      %p457 = scmp.eq.s32.totalorder %s36, 1
      %p458 = por %p456, %p457
      %p459 = scmp.ne.s32.totalorder %s450, %s451
      %p460 = scmp.eq.s32.totalorder %s36, 0
      %p461 = por %p459, %p460
      %p462 = scmp.ne.s32.totalorder %s450, %s451
      %p463 = scmp.eq.s32.totalorder %s37, 1
      %p464 = por %p462, %p463
      %p466 = scmp.ne.s32.totalorder %s451, %s465
      %p467 = scmp.eq.s32.totalorder %s37, 0
      %p468 = por %p466, %p467
      %s470 = sadd.s32 %s469, 1
      %p473 = scmp.eq.s32.totalorder %s31, 1
      %p474 = scmp.ne.s32.totalorder %s469, %s471
      %p475 = scmp.eq.s32.totalorder %s31, 0
      %p476 = por %p474, %p475
      %p477 = scmp.ne.s32.totalorder %s469, %s471
      %p478 = scmp.eq.s32.totalorder %s36, 1
      %p479 = por %p477, %p478
      %p480 = scmp.ne.s32.totalorder %s471, %s472
      %p481 = scmp.eq.s32.totalorder %s36, 0
      %p482 = por %p480, %p481
      %p483 = scmp.ne.s32.totalorder %s471, %s472
      %p484 = scmp.eq.s32.totalorder %s37, 1
      %p485 = por %p483, %p484
      %p487 = scmp.ne.s32.totalorder %s472, %s486
      %p488 = scmp.eq.s32.totalorder %s37, 0
      %p489 = por %p487, %p488
      %s491 = sadd.s32 %s490, 1
      %p494 = scmp.eq.s32.totalorder %s31, 1
      %p495 = scmp.ne.s32.totalorder %s490, %s492
      %p496 = scmp.eq.s32.totalorder %s31, 0
      %p497 = por %p495, %p496
      %p498 = scmp.ne.s32.totalorder %s490, %s492
      %p499 = scmp.eq.s32.totalorder %s36, 1
      %p500 = por %p498, %p499
      %p501 = scmp.ne.s32.totalorder %s492, %s493
      %p502 = scmp.eq.s32.totalorder %s36, 0
      %p503 = por %p501, %p502
      %p504 = scmp.ne.s32.totalorder %s492, %s493
      %p505 = scmp.eq.s32.totalorder %s37, 1
      %p506 = por %p504, %p505
      %p508 = scmp.ne.s32.totalorder %s493, %s507
      %p509 = scmp.eq.s32.totalorder %s37, 0
      %p510 = por %p508, %p509
      %s511 = ssub.s32 %s31, %s38
      %p512 = scmp.eq.s32.totalorder %s511, 0
      %s514 = sadd.s32 %s513, 1
      %s515 = scalar_select %p512, %s513, %s514
      %p518 = pneg %p512
      %p519 = scmp.eq.s32.totalorder %s31, 1
      %p520 = por %p518, %p519
      %p521 = scmp.ne.s32.totalorder %s513, %s516
      %p522 = scmp.eq.s32.totalorder %s31, 0
      %p523 = por %p521, %p522
      %p524 = scmp.ne.s32.totalorder %s513, %s516
      %p525 = scmp.eq.s32.totalorder %s36, 1
      %p526 = por %p524, %p525
      %p527 = scmp.ne.s32.totalorder %s516, %s517
      %p528 = scmp.eq.s32.totalorder %s36, 0
      %p529 = por %p527, %p528
      %p530 = scmp.ne.s32.totalorder %s516, %s517
      %p531 = scmp.eq.s32.totalorder %s37, 1
      %p532 = por %p530, %p531
      %p534 = scmp.ne.s32.totalorder %s517, %s533
      %p535 = scmp.eq.s32.totalorder %s37, 0
      %p536 = por %p534, %p535
      %p537 = scmp.le.s32.totalorder 1, %s31
      %p538 = scmp.lt.s32.totalorder %s31, 3
      %p539 = pnand %p537, %p538
      %p540 = pneg %p539
      // Predicated region
      $region9: #{tpu_custom_call.1} parent=5 // pred_check
        _
      $region10: #{tpu_custom_call.1} parent=5 // pred_check_branch
        %542 = sbr.rel (%p539) target = $region12
      $region11: #{tpu_custom_call.1} parent=5 // pred_region
        %s543 = ssub.s32 %s31, 1
        // Predicated region
        $region13: #{tpu_custom_call.1} parent=11 // pred_check
          %p544 = pneg %p104
        $region14: #{tpu_custom_call.1} parent=11 // pred_check_branch
          %546 = sbr.rel (%p544) target = $region16
        $region15: #{tpu_custom_call.1} parent=11 // pred_region
          _
        $region16: #{tpu_custom_call.1} parent=11 // pred_fallthru
          _
        // Predicated region
        $region17: #{tpu_custom_call.1} parent=11 // pred_check
          %p547 = pneg %p125
        $region18: #{tpu_custom_call.1} parent=11 // pred_check_branch
          %549 = sbr.rel (%p547) target = $region20
        $region19: #{tpu_custom_call.1} parent=11 // pred_region
          _
        $region20: #{tpu_custom_call.1} parent=11 // pred_fallthru
          _
        // Predicated region
        $region21: #{tpu_custom_call.1} parent=11 // pred_check
          %p550 = pneg %p146
        $region22: #{tpu_custom_call.1} parent=11 // pred_check_branch
          %552 = sbr.rel (%p550) target = $region24
        $region23: #{tpu_custom_call.1} parent=11 // pred_region
          _
        $region24: #{tpu_custom_call.1} parent=11 // pred_fallthru
          _
        // Predicated region
        $region25: #{tpu_custom_call.1} parent=11 // pred_check
          %p553 = pneg %p167
        $region26: #{tpu_custom_call.1} parent=11 // pred_check_branch
          %555 = sbr.rel (%p553) target = $region28
        $region27: #{tpu_custom_call.1} parent=11 // pred_region
          _
        $region28: #{tpu_custom_call.1} parent=11 // pred_fallthru
          _
        // Predicated region
        $region29: #{tpu_custom_call.1} parent=11 // pred_check
          %p556 = pneg %p188
        $region30: #{tpu_custom_call.1} parent=11 // pred_check_branch
          %558 = sbr.rel (%p556) target = $region32
        $region31: #{tpu_custom_call.1} parent=11 // pred_region
          _
        $region32: #{tpu_custom_call.1} parent=11 // pred_fallthru
          _
        // Predicated region
        $region33: #{tpu_custom_call.1} parent=11 // pred_check
          %p559 = pneg %p209
        $region34: #{tpu_custom_call.1} parent=11 // pred_check_branch
          %561 = sbr.rel (%p559) target = $region36
        $region35: #{tpu_custom_call.1} parent=11 // pred_region
          _
        $region36: #{tpu_custom_call.1} parent=11 // pred_fallthru
          _
        // Predicated region
        $region37: #{tpu_custom_call.1} parent=11 // pred_check
          %p562 = pneg %p230
        $region38: #{tpu_custom_call.1} parent=11 // pred_check_branch
          %564 = sbr.rel (%p562) target = $region40
        $region39: #{tpu_custom_call.1} parent=11 // pred_region
          _
        $region40: #{tpu_custom_call.1} parent=11 // pred_fallthru
          _
        // Predicated region
        $region41: #{tpu_custom_call.1} parent=11 // pred_check
          %p565 = pneg %p251
        $region42: #{tpu_custom_call.1} parent=11 // pred_check_branch
          %567 = sbr.rel (%p565) target = $region44
        $region43: #{tpu_custom_call.1} parent=11 // pred_region
          _
        $region44: #{tpu_custom_call.1} parent=11 // pred_fallthru
          _
        // Predicated region
        $region45: #{tpu_custom_call.1} parent=11 // pred_check
          %p568 = pneg %p272
        $region46: #{tpu_custom_call.1} parent=11 // pred_check_branch
          %570 = sbr.rel (%p568) target = $region48
        $region47: #{tpu_custom_call.1} parent=11 // pred_region
          _
        $region48: #{tpu_custom_call.1} parent=11 // pred_fallthru
          _
        // Predicated region
        $region49: #{tpu_custom_call.1} parent=11 // pred_check
          %p571 = pneg %p293
        $region50: #{tpu_custom_call.1} parent=11 // pred_check_branch
          %573 = sbr.rel (%p571) target = $region52
        $region51: #{tpu_custom_call.1} parent=11 // pred_region
          _
        $region52: #{tpu_custom_call.1} parent=11 // pred_fallthru
          _
        // Predicated region
        $region53: #{tpu_custom_call.1} parent=11 // pred_check
          %p574 = pneg %p314
        $region54: #{tpu_custom_call.1} parent=11 // pred_check_branch
          %576 = sbr.rel (%p574) target = $region56
        $region55: #{tpu_custom_call.1} parent=11 // pred_region
          _
        $region56: #{tpu_custom_call.1} parent=11 // pred_fallthru
          _
        // Predicated region
        $region57: #{tpu_custom_call.1} parent=11 // pred_check
          %p577 = pneg %p335
        $region58: #{tpu_custom_call.1} parent=11 // pred_check_branch
          %579 = sbr.rel (%p577) target = $region60
        $region59: #{tpu_custom_call.1} parent=11 // pred_region
          _
        $region60: #{tpu_custom_call.1} parent=11 // pred_fallthru
          _
        // Predicated region
        $region61: #{tpu_custom_call.1} parent=11 // pred_check
          %p580 = pneg %p356
        $region62: #{tpu_custom_call.1} parent=11 // pred_check_branch
          %582 = sbr.rel (%p580) target = $region64
        $region63: #{tpu_custom_call.1} parent=11 // pred_region
          _
        $region64: #{tpu_custom_call.1} parent=11 // pred_fallthru
          _
        // Predicated region
        $region65: #{tpu_custom_call.1} parent=11 // pred_check
          %p583 = pneg %p377
        $region66: #{tpu_custom_call.1} parent=11 // pred_check_branch
          %585 = sbr.rel (%p583) target = $region68
        $region67: #{tpu_custom_call.1} parent=11 // pred_region
          _
        $region68: #{tpu_custom_call.1} parent=11 // pred_fallthru
          _
        // Predicated region
        $region69: #{tpu_custom_call.1} parent=11 // pred_check
          %p586 = pneg %p398
        $region70: #{tpu_custom_call.1} parent=11 // pred_check_branch
          %588 = sbr.rel (%p586) target = $region72
        $region71: #{tpu_custom_call.1} parent=11 // pred_region
          _
        $region72: #{tpu_custom_call.1} parent=11 // pred_fallthru
          _
        // Predicated region
        $region73: #{tpu_custom_call.1} parent=11 // pred_check
          %p589 = pneg %p419
        $region74: #{tpu_custom_call.1} parent=11 // pred_check_branch
          %591 = sbr.rel (%p589) target = $region76
        $region75: #{tpu_custom_call.1} parent=11 // pred_region
          _
        $region76: #{tpu_custom_call.1} parent=11 // pred_fallthru
          _
        // Predicated region
        $region77: #{tpu_custom_call.1} parent=11 // pred_check
          %p592 = pneg %p440
        $region78: #{tpu_custom_call.1} parent=11 // pred_check_branch
          %594 = sbr.rel (%p592) target = $region80
        $region79: #{tpu_custom_call.1} parent=11 // pred_region
          _
        $region80: #{tpu_custom_call.1} parent=11 // pred_fallthru
          _
        // Predicated region
        $region81: #{tpu_custom_call.1} parent=11 // pred_check
          %p595 = pneg %p461
        $region82: #{tpu_custom_call.1} parent=11 // pred_check_branch
          %597 = sbr.rel (%p595) target = $region84
        $region83: #{tpu_custom_call.1} parent=11 // pred_region
          _
        $region84: #{tpu_custom_call.1} parent=11 // pred_fallthru
          _
        // Predicated region
        $region85: #{tpu_custom_call.1} parent=11 // pred_check
          %p598 = pneg %p482
        $region86: #{tpu_custom_call.1} parent=11 // pred_check_branch
          %600 = sbr.rel (%p598) target = $region88
        $region87: #{tpu_custom_call.1} parent=11 // pred_region
          _
        $region88: #{tpu_custom_call.1} parent=11 // pred_fallthru
          _
        // Predicated region
        $region89: #{tpu_custom_call.1} parent=11 // pred_check
          %p601 = pneg %p503
        $region90: #{tpu_custom_call.1} parent=11 // pred_check_branch
          %603 = sbr.rel (%p601) target = $region92
        $region91: #{tpu_custom_call.1} parent=11 // pred_region
          _
        $region92: #{tpu_custom_call.1} parent=11 // pred_fallthru
          _
      $region12: #{tpu_custom_call.1} parent=5 // pred_fallthru
        _
      %p604 = scmp.lt.s32.totalorder %s31, 2
      // Predicated region
      $region93: #{tpu_custom_call.1} parent=5 // pred_check
        %p605 = pneg %p604
      $region94: #{tpu_custom_call.1} parent=5 // pred_check_branch
        %607 = sbr.rel (%p605) target = $region96
      $region95: #{tpu_custom_call.1} parent=5 // pred_region
        // Predicated region
        $region97: #{tpu_custom_call.1} parent=95 // pred_check
          %p608 = pneg %p51
        $region98: #{tpu_custom_call.1} parent=95 // pred_check_branch
          %610 = sbr.rel (%p608) target = $region100
        $region99: #{tpu_custom_call.1} parent=95 // pred_region
          %s611 = smul.u32 2, %s31
          %p612 = scmp.lt.s32.totalorder %s611, 3
          %s613 = scalar_select %p612, %s611, 3
          %s614 = smul.addr %s613, 8
          %s615 = scalar_lea.vmem %s0, %s614
          %s616 = smul.u32 2, %s31
        $region100: #{tpu_custom_call.1} parent=95 // pred_fallthru
          _
        // Predicated region
        $region101: #{tpu_custom_call.1} parent=95 // pred_check
          %p617 = pneg %p77
        $region102: #{tpu_custom_call.1} parent=95 // pred_check_branch
          %619 = sbr.rel (%p617) target = $region104
        $region103: #{tpu_custom_call.1} parent=95 // pred_region
          %s620 = smul.u32 2, %s31
          %p621 = scmp.lt.s32.totalorder %s620, 3
          %s622 = scalar_select %p621, %s620, 3
          %s623 = smul.addr %s622, 8
          %s624 = scalar_lea.vmem %s1, %s623
          %s625 = smul.u32 2, %s31
        $region104: #{tpu_custom_call.1} parent=95 // pred_fallthru
          _
      $region96: #{tpu_custom_call.1} parent=5 // pred_fallthru
        _
      %p626 = scmp.le.s32.totalorder 1, %s31
      %p627 = scmp.lt.s32.totalorder %s31, 3
      %p628 = pnand %p626, %p627
      %p629 = pneg %p628
      // Predicated region
      $region105: #{tpu_custom_call.1} parent=5 // pred_check
        _
      $region106: #{tpu_custom_call.1} parent=5 // pred_check_branch
        %631 = sbr.rel (%p628) target = $region108
      $region107: #{tpu_custom_call.1} parent=5 // pred_region
        %s632 = ssub.s32 %s31, 1
        %s633 = smul.u32 2, %s36
        %p634 = scmp.lt.s32.totalorder %s633, 3
        %s635 = scalar_select %p634, %s633, 3
        %s636 = smul.addr %s635, 8
        %s637 = scalar_lea.vmem %s0, %s636
        %p638 = pneg %p57
        %p639 = pneg %p54
        %s640 = smul.u32 2, %s36
        %p641 = scmp.lt.s32.totalorder %s640, 3
        %s642 = scalar_select %p641, %s640, 3
        %s643 = smul.addr %s642, 8
        %s644 = scalar_lea.vmem %s1, %s643
        %p645 = pneg %p83
        %p646 = pneg %p80
        %p647 = pneg %p104
        %p648 = pneg %p101
        %p649 = pneg %p125
        %p650 = pneg %p122
        %p651 = pneg %p146
        %p652 = pneg %p143
        %p653 = pneg %p167
        %p654 = pneg %p164
        %p655 = pneg %p188
        %p656 = pneg %p185
        %p657 = pneg %p209
        %p658 = pneg %p206
        %p659 = pneg %p230
        %p660 = pneg %p227
        %p661 = pneg %p251
        %p662 = pneg %p248
        %p663 = pneg %p272
        %p664 = pneg %p269
        %p665 = pneg %p293
        %p666 = pneg %p290
        %p667 = pneg %p314
        %p668 = pneg %p311
        %p669 = pneg %p335
        %p670 = pneg %p332
        %p671 = pneg %p356
        %p672 = pneg %p353
        %p673 = pneg %p377
        %p674 = pneg %p374
        %p675 = pneg %p398
        %p676 = pneg %p395
        %p677 = pneg %p419
        %p678 = pneg %p416
        %p679 = pneg %p440
        %p680 = pneg %p437
        %p681 = pneg %p461
        %p682 = pneg %p458
        %p683 = pneg %p482
        %p684 = pneg %p479
        %p685 = pneg %p503
        %p686 = pneg %p500
        %p687 = pneg %p529
        %p688 = pneg %p526
        %s689 = sand.u32 %s516, 1
        %s690 = scalar_lea.sflag [#allocation3], %s689
        %s691 = sand.u32 %s516, 1
        %s692 = smul.addr %s691, 16
        %s693 = scalar_lea.vmem [#allocation2], %s692
        %s694 = smul.u32 2, %s36
        %p695 = scmp.lt.s32.totalorder %s694, 3
        %s696 = scalar_select %p695, %s694, 3
        %s697 = smul.addr %s696, 8
        %s698 = scalar_lea.vmem %s0, %s697
        %s699 = smul.u32 2, %s36
        %s700 = smul.u32 2, %s36
        %p701 = scmp.lt.s32.totalorder %s700, 3
        %s702 = scalar_select %p701, %s700, 3
        %s703 = smul.addr %s702, 8
        %s704 = scalar_lea.vmem %s1, %s703
        %s705 = smul.u32 2, %s36
        %s706 = smul.u32 2, %s36
        %v707 = vld [vmem:[%s698] sm:$0xff]
        %v708 = vld [vmem:[%s698 + $0x8] sm:$0xff]
        %v709 = vld [vmem:[%s704] sm:$0xff]
        %v710 = vld [vmem:[%s704 + $0x8] sm:$0xff]
        %v711 = vld [vmem:[%s2] sm:$0xff]
        %v712 = vld [vmem:[%s2 + $0x8] sm:$0xff]
        %v713 = vld [vmem:[%s2 + $0x10] sm:$0xff]
        %v714 = vld [vmem:[%s2 + $0x18] sm:$0xff]
        %v715 = vld [vmem:[%s2 + $0x20] sm:$0xff]
        %v716 = vld [vmem:[%s2 + $0x28] sm:$0xff]
        %v717 = vld [vmem:[%s2 + $0x30] sm:$0xff]
        %v718 = vld [vmem:[%s2 + $0x38] sm:$0xff]
        %v719 = vld [vmem:[%s2 + $0x40] sm:$0xff]
        %v720 = vld [vmem:[%s2 + $0x48] sm:$0xff]
        %v721 = vld [vmem:[%s2 + $0x50] sm:$0xff]
        %v722 = vld [vmem:[%s2 + $0x58] sm:$0xff]
        %v723 = vld [vmem:[%s2 + $0x60] sm:$0xff]
        %v724 = vld [vmem:[%s2 + $0x68] sm:$0xff]
        %v725 = vld [vmem:[%s2 + $0x70] sm:$0xff]
        %v726 = vld [vmem:[%s2 + $0x78] sm:$0xff]
        %v727 = vld [vmem:[%s3] sm:$0x1]
        %v729 = vlaneseq
        %v730 = vshrl.u32 %v729, 7
        %v731 = vsub.s32 0, %v730
        %v732 = vrot.slane %v727, %v731
        %734 = vmatprep.subr.mxu0 0.0
        %735 = vmatpush1.msra.mxu0 %v711
        %736 = vmatprep.subr.mxu0 0.0
        %737 = vmatpush1.msra.mxu0 %v712
        %738 = vmatprep.subr.mxu0 0.0
        %739 = vmatpush1.msra.mxu0 %v713
        %740 = vmatprep.subr.mxu0 0.0
        %741 = vmatpush1.msra.mxu0 %v714
        %742 = vmatprep.subr.mxu0 0.0
        %743 = vmatpush1.msra.mxu0 %v715
        %744 = vmatprep.subr.mxu0 0.0
        %745 = vmatpush1.msra.mxu0 %v716
        %746 = vmatprep.subr.mxu0 0.0
        %747 = vmatpush1.msra.mxu0 %v717
        %748 = vmatprep.subr.mxu0 0.0
        %749 = vmatpush1.msra.mxu0 %v718
        %750 = vmatprep.subr.mxu0 0.0
        %751 = vmatpush1.msra.mxu0 %v719
        %752 = vmatprep.subr.mxu0 0.0
        %753 = vmatpush1.msra.mxu0 %v720
        %754 = vmatprep.subr.mxu0 0.0
        %755 = vmatpush1.msra.mxu0 %v721
        %756 = vmatprep.subr.mxu0 0.0
        %757 = vmatpush1.msra.mxu0 %v722
        %758 = vmatprep.subr.mxu0 0.0
        %759 = vmatpush1.msra.mxu0 %v723
        %760 = vmatprep.subr.mxu0 0.0
        %761 = vmatpush1.msra.mxu0 %v724
        %762 = vmatprep.subr.mxu0 0.0
        %763 = vmatpush1.msra.mxu0 %v725
        %764 = vmatprep.subr.mxu0 0.0
        %765 = vmatpush1.msra.mxu0 %v726
        %766 = vmatprep.subr.mxu0 0.0
        %767 = vmatpush1.msra.mxu0 0.0
        %768 = vmatprep.subr.mxu0 0.0
        %769 = vmatpush1.msra.mxu0 0.0
        %770 = vmatprep.subr.mxu0 0.0
        %771 = vmatpush1.msra.mxu0 0.0
        %772 = vmatprep.subr.mxu0 0.0
        %773 = vmatpush1.msra.mxu0 0.0
        %774 = vmatprep.subr.mxu0 0.0
        %775 = vmatpush1.msra.mxu0 0.0
        %776 = vmatprep.subr.mxu0 0.0
        %777 = vmatpush1.msra.mxu0 0.0
        %778 = vmatprep.subr.mxu0 0.0
        %779 = vmatpush1.msra.mxu0 0.0
        %780 = vmatprep.subr.mxu0 0.0
        %781 = vmatpush1.msra.mxu0 0.0
        %782 = vmatprep.subr.mxu0 0.0
        %783 = vmatpush1.msra.mxu0 0.0
        %784 = vmatprep.subr.mxu0 0.0
        %785 = vmatpush1.msra.mxu0 0.0
        %786 = vmatprep.subr.mxu0 0.0
        %787 = vmatpush1.msra.mxu0 0.0
        %788 = vmatprep.subr.mxu0 0.0
        %789 = vmatpush1.msra.mxu0 0.0
        %790 = vmatprep.subr.mxu0 0.0
        %791 = vmatpush1.msra.mxu0 0.0
        %792 = vmatprep.subr.mxu0 0.0
        %793 = vmatpush1.msra.mxu0 0.0
        %794 = vmatprep.subr.mxu0 0.0
        %795 = vmatpush1.msra.mxu0 0.0
        %796 = vmatprep.subr.mxu0 0.0
        %797 = vmatpush1.msra.mxu0 0.0
        %798 = vmatprep.mubr.f32.mxu0 0.0
        %799 = vmatmul.mubr.f32.gmra.mrb[0].mxu0 %v709
        %v800 = vpop.f32.mrb[0].mxu0
        %v801 = vadd.f32 %v732, %v800
        %v802 = vpop.f32.mrb[0].mxu0
        %803 = vmatprep.mubr.f32.mxu0 0.0
        %804 = vmatmul.mubr.f32.gmra.mrb[0].mxu0 %v710
        %v805 = vpop.f32.mrb[0].mxu0
        %v806 = vadd.f32 %v732, %v805
        %v807 = vpop.f32.mrb[0].mxu0
        %808 = vdwg.mxu0
        %v809 = vld [vmem:[%s4] sm:$0xff]
        %v810 = vld [vmem:[%s4 + $0x8] sm:$0xff]
        %v811 = vld [vmem:[%s4 + $0x10] sm:$0xff]
        %v812 = vld [vmem:[%s4 + $0x18] sm:$0xff]
        %v813 = vld [vmem:[%s4 + $0x20] sm:$0xff]
        %v814 = vld [vmem:[%s4 + $0x28] sm:$0xff]
        %v815 = vld [vmem:[%s4 + $0x30] sm:$0xff]
        %v816 = vld [vmem:[%s4 + $0x38] sm:$0xff]
        %v817 = vld [vmem:[%s4 + $0x40] sm:$0xff]
        %v818 = vld [vmem:[%s4 + $0x48] sm:$0xff]
        %v819 = vld [vmem:[%s4 + $0x50] sm:$0xff]
        %v820 = vld [vmem:[%s4 + $0x58] sm:$0xff]
        %v821 = vld [vmem:[%s4 + $0x60] sm:$0xff]
        %v822 = vld [vmem:[%s4 + $0x68] sm:$0xff]
        %v823 = vld [vmem:[%s4 + $0x70] sm:$0xff]
        %v824 = vld [vmem:[%s4 + $0x78] sm:$0xff]
        %v825 = vld [vmem:[%s5] sm:$0x1]
        %v827 = vlaneseq
        %v828 = vshrl.u32 %v827, 7
        %v829 = vsub.s32 0, %v828
        %v830 = vrot.slane %v825, %v829
        %832 = vmatprep.subr.mxu0 0.0
        %833 = vmatpush1.msra.mxu0 %v809
        %834 = vmatprep.subr.mxu0 0.0
        %835 = vmatpush1.msra.mxu0 %v810
        %836 = vmatprep.subr.mxu0 0.0
        %837 = vmatpush1.msra.mxu0 %v811
        %838 = vmatprep.subr.mxu0 0.0
        %839 = vmatpush1.msra.mxu0 %v812
        %840 = vmatprep.subr.mxu0 0.0
        %841 = vmatpush1.msra.mxu0 %v813
        %842 = vmatprep.subr.mxu0 0.0
        %843 = vmatpush1.msra.mxu0 %v814
        %844 = vmatprep.subr.mxu0 0.0
        %845 = vmatpush1.msra.mxu0 %v815
        %846 = vmatprep.subr.mxu0 0.0
        %847 = vmatpush1.msra.mxu0 %v816
        %848 = vmatprep.subr.mxu0 0.0
        %849 = vmatpush1.msra.mxu0 %v817
        %850 = vmatprep.subr.mxu0 0.0
        %851 = vmatpush1.msra.mxu0 %v818
        %852 = vmatprep.subr.mxu0 0.0
        %853 = vmatpush1.msra.mxu0 %v819
        %854 = vmatprep.subr.mxu0 0.0
        %855 = vmatpush1.msra.mxu0 %v820
        %856 = vmatprep.subr.mxu0 0.0
        %857 = vmatpush1.msra.mxu0 %v821
        %858 = vmatprep.subr.mxu0 0.0
        %859 = vmatpush1.msra.mxu0 %v822
        %860 = vmatprep.subr.mxu0 0.0
        %861 = vmatpush1.msra.mxu0 %v823
        %862 = vmatprep.subr.mxu0 0.0
        %863 = vmatpush1.msra.mxu0 %v824
        %864 = vmatprep.subr.mxu0 0.0
        %865 = vmatpush1.msra.mxu0 0.0
        %866 = vmatprep.subr.mxu0 0.0
        %867 = vmatpush1.msra.mxu0 0.0
        %868 = vmatprep.subr.mxu0 0.0
        %869 = vmatpush1.msra.mxu0 0.0
        %870 = vmatprep.subr.mxu0 0.0
        %871 = vmatpush1.msra.mxu0 0.0
        %872 = vmatprep.subr.mxu0 0.0
        %873 = vmatpush1.msra.mxu0 0.0
        %874 = vmatprep.subr.mxu0 0.0
        %875 = vmatpush1.msra.mxu0 0.0
        %876 = vmatprep.subr.mxu0 0.0
        %877 = vmatpush1.msra.mxu0 0.0
        %878 = vmatprep.subr.mxu0 0.0
        %879 = vmatpush1.msra.mxu0 0.0
        %880 = vmatprep.subr.mxu0 0.0
        %881 = vmatpush1.msra.mxu0 0.0
        %882 = vmatprep.subr.mxu0 0.0
        %883 = vmatpush1.msra.mxu0 0.0
        %884 = vmatprep.subr.mxu0 0.0
        %885 = vmatpush1.msra.mxu0 0.0
        %886 = vmatprep.subr.mxu0 0.0
        %887 = vmatpush1.msra.mxu0 0.0
        %888 = vmatprep.subr.mxu0 0.0
        %889 = vmatpush1.msra.mxu0 0.0
        %890 = vmatprep.subr.mxu0 0.0
        %891 = vmatpush1.msra.mxu0 0.0
        %892 = vmatprep.subr.mxu0 0.0
        %893 = vmatpush1.msra.mxu0 0.0
        %894 = vmatprep.subr.mxu0 0.0
        %895 = vmatpush1.msra.mxu0 0.0
        %896 = vmatprep.mubr.f32.mxu0 0.0
        %897 = vmatmul.mubr.f32.gmra.mrb[0].mxu0 %v707
        %v898 = vpop.f32.mrb[0].mxu0
        %v899 = vadd.f32 %v830, %v898
        %v900 = vpop.f32.mrb[0].mxu0
        %901 = vmatprep.mubr.f32.mxu0 0.0
        %902 = vmatmul.mubr.f32.gmra.mrb[0].mxu0 %v708
        %v903 = vpop.f32.mrb[0].mxu0
        %v904 = vadd.f32 %v830, %v903
        %v905 = vpop.f32.mrb[0].mxu0
        %906 = vdwg.mxu0
        %v907 = vld [vmem:[%s6] sm:$0xff]
        %v908 = vld [vmem:[%s6 + $0x8] sm:$0xff]
        %v909 = vld [vmem:[%s6 + $0x10] sm:$0xff]
        %v910 = vld [vmem:[%s6 + $0x18] sm:$0xff]
        %v911 = vld [vmem:[%s6 + $0x20] sm:$0xff]
        %v912 = vld [vmem:[%s6 + $0x28] sm:$0xff]
        %v913 = vld [vmem:[%s6 + $0x30] sm:$0xff]
        %v914 = vld [vmem:[%s6 + $0x38] sm:$0xff]
        %v915 = vld [vmem:[%s6 + $0x40] sm:$0xff]
        %v916 = vld [vmem:[%s6 + $0x48] sm:$0xff]
        %v917 = vld [vmem:[%s6 + $0x50] sm:$0xff]
        %v918 = vld [vmem:[%s6 + $0x58] sm:$0xff]
        %v919 = vld [vmem:[%s6 + $0x60] sm:$0xff]
        %v920 = vld [vmem:[%s6 + $0x68] sm:$0xff]
        %v921 = vld [vmem:[%s6 + $0x70] sm:$0xff]
        %v922 = vld [vmem:[%s6 + $0x78] sm:$0xff]
        %v923 = vld [vmem:[%s7] sm:$0x1]
        %v925 = vlaneseq
        %v926 = vshrl.u32 %v925, 7
        %v927 = vsub.s32 0, %v926
        %v928 = vrot.slane %v923, %v927
        %930 = vmatprep.subr.mxu0 0.0
        %931 = vmatpush1.msra.mxu0 %v907
        %932 = vmatprep.subr.mxu0 0.0
        %933 = vmatpush1.msra.mxu0 %v908
        %934 = vmatprep.subr.mxu0 0.0
        %935 = vmatpush1.msra.mxu0 %v909
        %936 = vmatprep.subr.mxu0 0.0
        %937 = vmatpush1.msra.mxu0 %v910
        %938 = vmatprep.subr.mxu0 0.0
        %939 = vmatpush1.msra.mxu0 %v911
        %940 = vmatprep.subr.mxu0 0.0
        %941 = vmatpush1.msra.mxu0 %v912
        %942 = vmatprep.subr.mxu0 0.0
        %943 = vmatpush1.msra.mxu0 %v913
        %944 = vmatprep.subr.mxu0 0.0
        %945 = vmatpush1.msra.mxu0 %v914
        %946 = vmatprep.subr.mxu0 0.0
        %947 = vmatpush1.msra.mxu0 %v915
        %948 = vmatprep.subr.mxu0 0.0
        %949 = vmatpush1.msra.mxu0 %v916
        %950 = vmatprep.subr.mxu0 0.0
        %951 = vmatpush1.msra.mxu0 %v917
        %952 = vmatprep.subr.mxu0 0.0
        %953 = vmatpush1.msra.mxu0 %v918
        %954 = vmatprep.subr.mxu0 0.0
        %955 = vmatpush1.msra.mxu0 %v919
        %956 = vmatprep.subr.mxu0 0.0
        %957 = vmatpush1.msra.mxu0 %v920
        %958 = vmatprep.subr.mxu0 0.0
        %959 = vmatpush1.msra.mxu0 %v921
        %960 = vmatprep.subr.mxu0 0.0
        %961 = vmatpush1.msra.mxu0 %v922
        %962 = vmatprep.subr.mxu0 0.0
        %963 = vmatpush1.msra.mxu0 0.0
        %964 = vmatprep.subr.mxu0 0.0
        %965 = vmatpush1.msra.mxu0 0.0
        %966 = vmatprep.subr.mxu0 0.0
        %967 = vmatpush1.msra.mxu0 0.0
        %968 = vmatprep.subr.mxu0 0.0
        %969 = vmatpush1.msra.mxu0 0.0
        %970 = vmatprep.subr.mxu0 0.0
        %971 = vmatpush1.msra.mxu0 0.0
        %972 = vmatprep.subr.mxu0 0.0
        %973 = vmatpush1.msra.mxu0 0.0
        %974 = vmatprep.subr.mxu0 0.0
        %975 = vmatpush1.msra.mxu0 0.0
        %976 = vmatprep.subr.mxu0 0.0
        %977 = vmatpush1.msra.mxu0 0.0
        %978 = vmatprep.subr.mxu0 0.0
        %979 = vmatpush1.msra.mxu0 0.0
        %980 = vmatprep.subr.mxu0 0.0
        %981 = vmatpush1.msra.mxu0 0.0
        %982 = vmatprep.subr.mxu0 0.0
        %983 = vmatpush1.msra.mxu0 0.0
        %984 = vmatprep.subr.mxu0 0.0
        %985 = vmatpush1.msra.mxu0 0.0
        %986 = vmatprep.subr.mxu0 0.0
        %987 = vmatpush1.msra.mxu0 0.0
        %988 = vmatprep.subr.mxu0 0.0
        %989 = vmatpush1.msra.mxu0 0.0
        %990 = vmatprep.subr.mxu0 0.0
        %991 = vmatpush1.msra.mxu0 0.0
        %992 = vmatprep.subr.mxu0 0.0
        %993 = vmatpush1.msra.mxu0 0.0
        %994 = vmatprep.mubr.f32.mxu0 0.0
        %995 = vmatmul.mubr.f32.gmra.mrb[0].mxu0 %v709
        %v996 = vpop.f32.mrb[0].mxu0
        %v997 = vadd.f32 %v928, %v996
        %v998 = vpop.f32.mrb[0].mxu0
        %999 = vmatprep.mubr.f32.mxu0 0.0
        %1000 = vmatmul.mubr.f32.gmra.mrb[0].mxu0 %v710
        %v1001 = vpop.f32.mrb[0].mxu0
        %v1002 = vadd.f32 %v928, %v1001
        %v1003 = vpop.f32.mrb[0].mxu0
        %1004 = vdwg.mxu0
        %vm1005 = vcmask 130048
        %v1007 = vsel %vm1005, %v899, 0
        %v1010 = vsel %vm1005, %v904, 0
        %v1013 = vsel %vm1005, %v997, 0
        %v1016 = vsel %vm1005, %v1002, 0
        %1018 = vmatprep.subr.mxu0 0.0
        %1019 = vmatpush1.xpose.msra.mxu0 %v1013
        %1020 = vmatprep.subr.mxu0 0.0
        %1021 = vmatpush1.xpose.msra.mxu0 %v1016
        %1022 = vmatprep.subr.mxu0 0.0
        %1023 = vmatpush1.xpose.msra.mxu0 0.0
        %1024 = vmatprep.subr.mxu0 0.0
        %1025 = vmatpush1.xpose.msra.mxu0 0.0
        %1026 = vmatprep.subr.mxu0 0.0
        %1027 = vmatpush1.xpose.msra.mxu0 0.0
        %1028 = vmatprep.subr.mxu0 0.0
        %1029 = vmatpush1.xpose.msra.mxu0 0.0
        %1030 = vmatprep.subr.mxu0 0.0
        %1031 = vmatpush1.xpose.msra.mxu0 0.0
        %1032 = vmatprep.subr.mxu0 0.0
        %1033 = vmatpush1.xpose.msra.mxu0 0.0
        %1034 = vmatprep.subr.mxu0 0.0
        %1035 = vmatpush1.xpose.msra.mxu0 0.0
        %1036 = vmatprep.subr.mxu0 0.0
        %1037 = vmatpush1.xpose.msra.mxu0 0.0
        %1038 = vmatprep.subr.mxu0 0.0
        %1039 = vmatpush1.xpose.msra.mxu0 0.0
        %1040 = vmatprep.subr.mxu0 0.0
        %1041 = vmatpush1.xpose.msra.mxu0 0.0
        %1042 = vmatprep.subr.mxu0 0.0
        %1043 = vmatpush1.xpose.msra.mxu0 0.0
        %1044 = vmatprep.subr.mxu0 0.0
        %1045 = vmatpush1.xpose.msra.mxu0 0.0
        %1046 = vmatprep.subr.mxu0 0.0
        %1047 = vmatpush1.xpose.msra.mxu0 0.0
        %1048 = vmatprep.subr.mxu0 0.0
        %1049 = vmatpush1.xpose.msra.mxu0 0.0
        %1050 = vmatprep.subr.mxu0 0.0
        %1051 = vmatpush1.xpose.msra.mxu0 0.0
        %1052 = vmatprep.subr.mxu0 0.0
        %1053 = vmatpush1.xpose.msra.mxu0 0.0
        %1054 = vmatprep.subr.mxu0 0.0
        %1055 = vmatpush1.xpose.msra.mxu0 0.0
        %1056 = vmatprep.subr.mxu0 0.0
        %1057 = vmatpush1.xpose.msra.mxu0 0.0
        %1058 = vmatprep.subr.mxu0 0.0
        %1059 = vmatpush1.xpose.msra.mxu0 0.0
        %1060 = vmatprep.subr.mxu0 0.0
        %1061 = vmatpush1.xpose.msra.mxu0 0.0
        %1062 = vmatprep.subr.mxu0 0.0
        %1063 = vmatpush1.xpose.msra.mxu0 0.0
        %1064 = vmatprep.subr.mxu0 0.0
        %1065 = vmatpush1.xpose.msra.mxu0 0.0
        %1066 = vmatprep.subr.mxu0 0.0
        %1067 = vmatpush1.xpose.msra.mxu0 0.0
        %1068 = vmatprep.subr.mxu0 0.0
        %1069 = vmatpush1.xpose.msra.mxu0 0.0
        %1070 = vmatprep.subr.mxu0 0.0
        %1071 = vmatpush1.xpose.msra.mxu0 0.0
        %1072 = vmatprep.subr.mxu0 0.0
        %1073 = vmatpush1.xpose.msra.mxu0 0.0
        %1074 = vmatprep.subr.mxu0 0.0
        %1075 = vmatpush1.xpose.msra.mxu0 0.0
        %1076 = vmatprep.subr.mxu0 0.0
        %1077 = vmatpush1.xpose.msra.mxu0 0.0
        %1078 = vmatprep.subr.mxu0 0.0
        %1079 = vmatpush1.xpose.msra.mxu0 0.0
        %1080 = vmatprep.subr.mxu0 0.0
        %1081 = vmatpush1.xpose.msra.mxu0 0.0
        %1082 = vmatprep.mubr.f32.mxu0 0.0
        %1083 = vmatmul.mubr.f32.gmra.mrb[0].mxu0 %v1007
        %v1084 = vpop.f32.mrb[0].mxu0
        %v1085 = vadd.f32 0.0, %v1084
        %v1086 = vpop.f32.mrb[0].mxu0
        %1087 = vmatprep.mubr.f32.mxu0 0.0
        %1088 = vmatmul.mubr.f32.gmra.mrb[0].mxu0 %v1010
        %v1089 = vpop.f32.mrb[0].mxu0
        %v1090 = vadd.f32 0.0, %v1089
        %v1091 = vpop.f32.mrb[0].mxu0
        %1092 = vdwg.mxu0
        %v1094 = vsel %vm1005, %v1085, 0
        %v1097 = vsel %vm1005, %v1090, 0
        %1099 = vmatprep.subr.mxu0 0.0
        %1100 = vmatpush1.msra.mxu0 %v801
        %1101 = vmatprep.subr.mxu0 0.0
        %1102 = vmatpush1.msra.mxu0 %v806
        %1103 = vmatprep.subr.mxu0 0.0
        %1104 = vmatpush1.msra.mxu0 0.0
        %1105 = vmatprep.subr.mxu0 0.0
        %1106 = vmatpush1.msra.mxu0 0.0
        %1107 = vmatprep.subr.mxu0 0.0
        %1108 = vmatpush1.msra.mxu0 0.0
        %1109 = vmatprep.subr.mxu0 0.0
        %1110 = vmatpush1.msra.mxu0 0.0
        %1111 = vmatprep.subr.mxu0 0.0
        %1112 = vmatpush1.msra.mxu0 0.0
        %1113 = vmatprep.subr.mxu0 0.0
        %1114 = vmatpush1.msra.mxu0 0.0
        %1115 = vmatprep.subr.mxu0 0.0
        %1116 = vmatpush1.msra.mxu0 0.0
        %1117 = vmatprep.subr.mxu0 0.0
        %1118 = vmatpush1.msra.mxu0 0.0
        %1119 = vmatprep.subr.mxu0 0.0
        %1120 = vmatpush1.msra.mxu0 0.0
        %1121 = vmatprep.subr.mxu0 0.0
        %1122 = vmatpush1.msra.mxu0 0.0
        %1123 = vmatprep.subr.mxu0 0.0
        %1124 = vmatpush1.msra.mxu0 0.0
        %1125 = vmatprep.subr.mxu0 0.0
        %1126 = vmatpush1.msra.mxu0 0.0
        %1127 = vmatprep.subr.mxu0 0.0
        %1128 = vmatpush1.msra.mxu0 0.0
        %1129 = vmatprep.subr.mxu0 0.0
        %1130 = vmatpush1.msra.mxu0 0.0
        %1131 = vmatprep.subr.mxu0 0.0
        %1132 = vmatpush1.msra.mxu0 0.0
        %1133 = vmatprep.subr.mxu0 0.0
        %1134 = vmatpush1.msra.mxu0 0.0
        %1135 = vmatprep.subr.mxu0 0.0
        %1136 = vmatpush1.msra.mxu0 0.0
        %1137 = vmatprep.subr.mxu0 0.0
        %1138 = vmatpush1.msra.mxu0 0.0
        %1139 = vmatprep.subr.mxu0 0.0
        %1140 = vmatpush1.msra.mxu0 0.0
        %1141 = vmatprep.subr.mxu0 0.0
        %1142 = vmatpush1.msra.mxu0 0.0
        %1143 = vmatprep.subr.mxu0 0.0
        %1144 = vmatpush1.msra.mxu0 0.0
        %1145 = vmatprep.subr.mxu0 0.0
        %1146 = vmatpush1.msra.mxu0 0.0
        %1147 = vmatprep.subr.mxu0 0.0
        %1148 = vmatpush1.msra.mxu0 0.0
        %1149 = vmatprep.subr.mxu0 0.0
        %1150 = vmatpush1.msra.mxu0 0.0
        %1151 = vmatprep.subr.mxu0 0.0
        %1152 = vmatpush1.msra.mxu0 0.0
        %1153 = vmatprep.subr.mxu0 0.0
        %1154 = vmatpush1.msra.mxu0 0.0
        %1155 = vmatprep.subr.mxu0 0.0
        %1156 = vmatpush1.msra.mxu0 0.0
        %1157 = vmatprep.subr.mxu0 0.0
        %1158 = vmatpush1.msra.mxu0 0.0
        %1159 = vmatprep.subr.mxu0 0.0
        %1160 = vmatpush1.msra.mxu0 0.0
        %1161 = vmatprep.subr.mxu0 0.0
        %1162 = vmatpush1.msra.mxu0 0.0
        %1163 = vmatprep.mubr.f32.mxu0 0.0
        %1164 = vmatmul.mubr.f32.gmra.mrb[0].mxu0 %v1094
        %v1165 = vpop.f32.mrb[0].mxu0
        %v1166 = vadd.f32 0.0, %v1165
        %v1167 = vpop.f32.mrb[0].mxu0
        %1168 = vmatprep.mubr.f32.mxu0 0.0
        %1169 = vmatmul.mubr.f32.gmra.mrb[0].mxu0 %v1097
        %v1170 = vpop.f32.mrb[0].mxu0
        %v1171 = vadd.f32 0.0, %v1170
        %v1172 = vpop.f32.mrb[0].mxu0
        %1173 = vdwg.mxu0
        %v1174 = vld [vmem:[%s8] sm:$0xff]
        %v1175 = vld [vmem:[%s8 + $0x8] sm:$0xff]
        %v1176 = vld [vmem:[%s9] sm:$0x1]
        %v1178 = vlaneseq
        %v1179 = vshrl.u32 %v1178, 7
        %v1180 = vsub.s32 0, %v1179
        %v1181 = vrot.slane %v1176, %v1180
        %v1184 = vsel %vm1005, %v1166, 0
        %v1187 = vsel %vm1005, %v1171, 0
        %1189 = vmatprep.subr.mxu0 0.0
        %1190 = vmatpush1.msra.mxu0 %v1174
        %1191 = vmatprep.subr.mxu0 0.0
        %1192 = vmatpush1.msra.mxu0 %v1175
        %1193 = vmatprep.subr.mxu0 0.0
        %1194 = vmatpush1.msra.mxu0 0.0
        %1195 = vmatprep.subr.mxu0 0.0
        %1196 = vmatpush1.msra.mxu0 0.0
        %1197 = vmatprep.subr.mxu0 0.0
        %1198 = vmatpush1.msra.mxu0 0.0
        %1199 = vmatprep.subr.mxu0 0.0
        %1200 = vmatpush1.msra.mxu0 0.0
        %1201 = vmatprep.subr.mxu0 0.0
        %1202 = vmatpush1.msra.mxu0 0.0
        %1203 = vmatprep.subr.mxu0 0.0
        %1204 = vmatpush1.msra.mxu0 0.0
        %1205 = vmatprep.subr.mxu0 0.0
        %1206 = vmatpush1.msra.mxu0 0.0
        %1207 = vmatprep.subr.mxu0 0.0
        %1208 = vmatpush1.msra.mxu0 0.0
        %1209 = vmatprep.subr.mxu0 0.0
        %1210 = vmatpush1.msra.mxu0 0.0
        %1211 = vmatprep.subr.mxu0 0.0
        %1212 = vmatpush1.msra.mxu0 0.0
        %1213 = vmatprep.subr.mxu0 0.0
        %1214 = vmatpush1.msra.mxu0 0.0
        %1215 = vmatprep.subr.mxu0 0.0
        %1216 = vmatpush1.msra.mxu0 0.0
        %1217 = vmatprep.subr.mxu0 0.0
        %1218 = vmatpush1.msra.mxu0 0.0
        %1219 = vmatprep.subr.mxu0 0.0
        %1220 = vmatpush1.msra.mxu0 0.0
        %1221 = vmatprep.subr.mxu0 0.0
        %1222 = vmatpush1.msra.mxu0 0.0
        %1223 = vmatprep.subr.mxu0 0.0
        %1224 = vmatpush1.msra.mxu0 0.0
        %1225 = vmatprep.subr.mxu0 0.0
        %1226 = vmatpush1.msra.mxu0 0.0
        %1227 = vmatprep.subr.mxu0 0.0
        %1228 = vmatpush1.msra.mxu0 0.0
        %1229 = vmatprep.subr.mxu0 0.0
        %1230 = vmatpush1.msra.mxu0 0.0
        %1231 = vmatprep.subr.mxu0 0.0
        %1232 = vmatpush1.msra.mxu0 0.0
        %1233 = vmatprep.subr.mxu0 0.0
        %1234 = vmatpush1.msra.mxu0 0.0
        %1235 = vmatprep.subr.mxu0 0.0
        %1236 = vmatpush1.msra.mxu0 0.0
        %1237 = vmatprep.subr.mxu0 0.0
        %1238 = vmatpush1.msra.mxu0 0.0
        %1239 = vmatprep.subr.mxu0 0.0
        %1240 = vmatpush1.msra.mxu0 0.0
        %1241 = vmatprep.subr.mxu0 0.0
        %1242 = vmatpush1.msra.mxu0 0.0
        %1243 = vmatprep.subr.mxu0 0.0
        %1244 = vmatpush1.msra.mxu0 0.0
        %1245 = vmatprep.subr.mxu0 0.0
        %1246 = vmatpush1.msra.mxu0 0.0
        %1247 = vmatprep.subr.mxu0 0.0
        %1248 = vmatpush1.msra.mxu0 0.0
        %1249 = vmatprep.subr.mxu0 0.0
        %1250 = vmatpush1.msra.mxu0 0.0
        %1251 = vmatprep.subr.mxu0 0.0
        %1252 = vmatpush1.msra.mxu0 0.0
        %1253 = vmatprep.mubr.f32.mxu0 0.0
        %1254 = vmatmul.mubr.f32.gmra.mrb[0].mxu0 %v1184
        %v1255 = vpop.f32.mrb[0].mxu0
        %v1256 = vadd.f32 %v1181, %v1255
        %v1257 = vpop.f32.mrb[0].mxu0
        %1258 = vmatprep.mubr.f32.mxu0 0.0
        %1259 = vmatmul.mubr.f32.gmra.mrb[0].mxu0 %v1187
        %v1260 = vpop.f32.mrb[0].mxu0
        %v1261 = vadd.f32 %v1181, %v1260
        %v1262 = vpop.f32.mrb[0].mxu0
        %1263 = vdwg.mxu0
        %v1264 = vld [vmem:[%s10] sm:$0x1]
        %v1266 = vlaneseq
        %v1267 = vshrl.u32 %v1266, 7
        %v1268 = vsub.s32 0, %v1267
        %v1269 = vrot.slane %v1264, %v1268
        %v1271 = vmul.f32 %v1256, %v1269
        %v1272 = vmul.f32 %v1261, %v1269
        %v1273 = vld [vmem:[%s11] sm:$0x1]
        %v1275 = vlaneseq
        %v1276 = vshrl.u32 %v1275, 7
        %v1277 = vsub.s32 0, %v1276
        %v1278 = vrot.slane %v1273, %v1277
        %v1280 = vadd.f32 %v1271, %v1278
        %v1281 = vadd.f32 %v1272, %v1278
        %v1282 = vadd.f32 %v1280, %v707
        %v1283 = vadd.f32 %v1281, %v708
        %v1284 = vld [vmem:[%s12] sm:$0xff]
        %v1285 = vld [vmem:[%s12 + $0x8] sm:$0xff]
        %v1286 = vld [vmem:[%s12 + $0x10] sm:$0xff]
        %v1287 = vld [vmem:[%s12 + $0x18] sm:$0xff]
        %v1288 = vld [vmem:[%s12 + $0x20] sm:$0xff]
        %v1289 = vld [vmem:[%s12 + $0x28] sm:$0xff]
        %v1290 = vld [vmem:[%s12 + $0x30] sm:$0xff]
        %v1291 = vld [vmem:[%s12 + $0x38] sm:$0xff]
        %v1292 = vld [vmem:[%s12 + $0x40] sm:$0xff]
        %v1293 = vld [vmem:[%s12 + $0x48] sm:$0xff]
        %v1294 = vld [vmem:[%s12 + $0x50] sm:$0xff]
        %v1295 = vld [vmem:[%s12 + $0x58] sm:$0xff]
        %v1296 = vld [vmem:[%s12 + $0x60] sm:$0xff]
        %v1297 = vld [vmem:[%s12 + $0x68] sm:$0xff]
        %v1298 = vld [vmem:[%s12 + $0x70] sm:$0xff]
        %v1299 = vld [vmem:[%s12 + $0x78] sm:$0xff]
        %v1300 = vld [vmem:[%s13] sm:$0x1]
        %v1302 = vlaneseq
        %v1303 = vshrl.u32 %v1302, 7
        %v1304 = vsub.s32 0, %v1303
        %v1305 = vrot.slane %v1300, %v1304
        %1307 = vmatprep.subr.mxu0 0.0
        %1308 = vmatpush1.msra.mxu0 %v1284
        %1309 = vmatprep.subr.mxu0 0.0
        %1310 = vmatpush1.msra.mxu0 %v1285
        %1311 = vmatprep.subr.mxu0 0.0
        %1312 = vmatpush1.msra.mxu0 %v1286
        %1313 = vmatprep.subr.mxu0 0.0
        %1314 = vmatpush1.msra.mxu0 %v1287
        %1315 = vmatprep.subr.mxu0 0.0
        %1316 = vmatpush1.msra.mxu0 %v1288
        %1317 = vmatprep.subr.mxu0 0.0
        %1318 = vmatpush1.msra.mxu0 %v1289
        %1319 = vmatprep.subr.mxu0 0.0
        %1320 = vmatpush1.msra.mxu0 %v1290
        %1321 = vmatprep.subr.mxu0 0.0
        %1322 = vmatpush1.msra.mxu0 %v1291
        %1323 = vmatprep.subr.mxu0 0.0
        %1324 = vmatpush1.msra.mxu0 %v1292
        %1325 = vmatprep.subr.mxu0 0.0
        %1326 = vmatpush1.msra.mxu0 %v1293
        %1327 = vmatprep.subr.mxu0 0.0
        %1328 = vmatpush1.msra.mxu0 %v1294
        %1329 = vmatprep.subr.mxu0 0.0
        %1330 = vmatpush1.msra.mxu0 %v1295
        %1331 = vmatprep.subr.mxu0 0.0
        %1332 = vmatpush1.msra.mxu0 %v1296
        %1333 = vmatprep.subr.mxu0 0.0
        %1334 = vmatpush1.msra.mxu0 %v1297
        %1335 = vmatprep.subr.mxu0 0.0
        %1336 = vmatpush1.msra.mxu0 %v1298
        %1337 = vmatprep.subr.mxu0 0.0
        %1338 = vmatpush1.msra.mxu0 %v1299
        %1339 = vmatprep.subr.mxu0 0.0
        %1340 = vmatpush1.msra.mxu0 0.0
        %1341 = vmatprep.subr.mxu0 0.0
        %1342 = vmatpush1.msra.mxu0 0.0
        %1343 = vmatprep.subr.mxu0 0.0
        %1344 = vmatpush1.msra.mxu0 0.0
        %1345 = vmatprep.subr.mxu0 0.0
        %1346 = vmatpush1.msra.mxu0 0.0
        %1347 = vmatprep.subr.mxu0 0.0
        %1348 = vmatpush1.msra.mxu0 0.0
        %1349 = vmatprep.subr.mxu0 0.0
        %1350 = vmatpush1.msra.mxu0 0.0
        %1351 = vmatprep.subr.mxu0 0.0
        %1352 = vmatpush1.msra.mxu0 0.0
        %1353 = vmatprep.subr.mxu0 0.0
        %1354 = vmatpush1.msra.mxu0 0.0
        %1355 = vmatprep.subr.mxu0 0.0
        %1356 = vmatpush1.msra.mxu0 0.0
        %1357 = vmatprep.subr.mxu0 0.0
        %1358 = vmatpush1.msra.mxu0 0.0
        %1359 = vmatprep.subr.mxu0 0.0
        %1360 = vmatpush1.msra.mxu0 0.0
        %1361 = vmatprep.subr.mxu0 0.0
        %1362 = vmatpush1.msra.mxu0 0.0
        %1363 = vmatprep.subr.mxu0 0.0
        %1364 = vmatpush1.msra.mxu0 0.0
        %1365 = vmatprep.subr.mxu0 0.0
        %1366 = vmatpush1.msra.mxu0 0.0
        %1367 = vmatprep.subr.mxu0 0.0
        %1368 = vmatpush1.msra.mxu0 0.0
        %1369 = vmatprep.subr.mxu0 0.0
        %1370 = vmatpush1.msra.mxu0 0.0
        %1371 = vmatprep.mubr.f32.mxu0 0.0
        %1372 = vmatmul.mubr.f32.gmra.mrb[0].mxu0 %v709
        %v1373 = vpop.f32.mrb[0].mxu0
        %v1374 = vadd.f32 %v1305, %v1373
        %v1375 = vpop.f32.mrb[0].mxu0
        %1376 = vmatprep.mubr.f32.mxu0 0.0
        %1377 = vmatmul.mubr.f32.gmra.mrb[0].mxu0 %v710
        %v1378 = vpop.f32.mrb[0].mxu0
        %v1379 = vadd.f32 %v1305, %v1378
        %v1380 = vpop.f32.mrb[0].mxu0
        %1381 = vdwg.mxu0
        %v1382 = vld [vmem:[%s14] sm:$0xff]
        %v1383 = vld [vmem:[%s14 + $0x8] sm:$0xff]
        %v1384 = vld [vmem:[%s14 + $0x10] sm:$0xff]
        %v1385 = vld [vmem:[%s14 + $0x18] sm:$0xff]
        %v1386 = vld [vmem:[%s14 + $0x20] sm:$0xff]
        %v1387 = vld [vmem:[%s14 + $0x28] sm:$0xff]
        %v1388 = vld [vmem:[%s14 + $0x30] sm:$0xff]
        %v1389 = vld [vmem:[%s14 + $0x38] sm:$0xff]
        %v1390 = vld [vmem:[%s14 + $0x40] sm:$0xff]
        %v1391 = vld [vmem:[%s14 + $0x48] sm:$0xff]
        %v1392 = vld [vmem:[%s14 + $0x50] sm:$0xff]
        %v1393 = vld [vmem:[%s14 + $0x58] sm:$0xff]
        %v1394 = vld [vmem:[%s14 + $0x60] sm:$0xff]
        %v1395 = vld [vmem:[%s14 + $0x68] sm:$0xff]
        %v1396 = vld [vmem:[%s14 + $0x70] sm:$0xff]
        %v1397 = vld [vmem:[%s14 + $0x78] sm:$0xff]
        %v1398 = vld [vmem:[%s15] sm:$0x1]
        %v1400 = vlaneseq
        %v1401 = vshrl.u32 %v1400, 7
        %v1402 = vsub.s32 0, %v1401
        %v1403 = vrot.slane %v1398, %v1402
        %1405 = vmatprep.subr.mxu0 0.0
        %1406 = vmatpush1.msra.mxu0 %v1382
        %1407 = vmatprep.subr.mxu0 0.0
        %1408 = vmatpush1.msra.mxu0 %v1383
        %1409 = vmatprep.subr.mxu0 0.0
        %1410 = vmatpush1.msra.mxu0 %v1384
        %1411 = vmatprep.subr.mxu0 0.0
        %1412 = vmatpush1.msra.mxu0 %v1385
        %1413 = vmatprep.subr.mxu0 0.0
        %1414 = vmatpush1.msra.mxu0 %v1386
        %1415 = vmatprep.subr.mxu0 0.0
        %1416 = vmatpush1.msra.mxu0 %v1387
        %1417 = vmatprep.subr.mxu0 0.0
        %1418 = vmatpush1.msra.mxu0 %v1388
        %1419 = vmatprep.subr.mxu0 0.0
        %1420 = vmatpush1.msra.mxu0 %v1389
        %1421 = vmatprep.subr.mxu0 0.0
        %1422 = vmatpush1.msra.mxu0 %v1390
        %1423 = vmatprep.subr.mxu0 0.0
        %1424 = vmatpush1.msra.mxu0 %v1391
        %1425 = vmatprep.subr.mxu0 0.0
        %1426 = vmatpush1.msra.mxu0 %v1392
        %1427 = vmatprep.subr.mxu0 0.0
        %1428 = vmatpush1.msra.mxu0 %v1393
        %1429 = vmatprep.subr.mxu0 0.0
        %1430 = vmatpush1.msra.mxu0 %v1394
        %1431 = vmatprep.subr.mxu0 0.0
        %1432 = vmatpush1.msra.mxu0 %v1395
        %1433 = vmatprep.subr.mxu0 0.0
        %1434 = vmatpush1.msra.mxu0 %v1396
        %1435 = vmatprep.subr.mxu0 0.0
        %1436 = vmatpush1.msra.mxu0 %v1397
        %1437 = vmatprep.subr.mxu0 0.0
        %1438 = vmatpush1.msra.mxu0 0.0
        %1439 = vmatprep.subr.mxu0 0.0
        %1440 = vmatpush1.msra.mxu0 0.0
        %1441 = vmatprep.subr.mxu0 0.0
        %1442 = vmatpush1.msra.mxu0 0.0
        %1443 = vmatprep.subr.mxu0 0.0
        %1444 = vmatpush1.msra.mxu0 0.0
        %1445 = vmatprep.subr.mxu0 0.0
        %1446 = vmatpush1.msra.mxu0 0.0
        %1447 = vmatprep.subr.mxu0 0.0
        %1448 = vmatpush1.msra.mxu0 0.0
        %1449 = vmatprep.subr.mxu0 0.0
        %1450 = vmatpush1.msra.mxu0 0.0
        %1451 = vmatprep.subr.mxu0 0.0
        %1452 = vmatpush1.msra.mxu0 0.0
        %1453 = vmatprep.subr.mxu0 0.0
        %1454 = vmatpush1.msra.mxu0 0.0
        %1455 = vmatprep.subr.mxu0 0.0
        %1456 = vmatpush1.msra.mxu0 0.0
        %1457 = vmatprep.subr.mxu0 0.0
        %1458 = vmatpush1.msra.mxu0 0.0
        %1459 = vmatprep.subr.mxu0 0.0
        %1460 = vmatpush1.msra.mxu0 0.0
        %1461 = vmatprep.subr.mxu0 0.0
        %1462 = vmatpush1.msra.mxu0 0.0
        %1463 = vmatprep.subr.mxu0 0.0
        %1464 = vmatpush1.msra.mxu0 0.0
        %1465 = vmatprep.subr.mxu0 0.0
        %1466 = vmatpush1.msra.mxu0 0.0
        %1467 = vmatprep.subr.mxu0 0.0
        %1468 = vmatpush1.msra.mxu0 0.0
        %1469 = vmatprep.mubr.f32.mxu0 0.0
        %1470 = vmatmul.mubr.f32.gmra.mrb[0].mxu0 %v1282
        %v1471 = vpop.f32.mrb[0].mxu0
        %v1472 = vadd.f32 %v1403, %v1471
        %v1473 = vpop.f32.mrb[0].mxu0
        %1474 = vmatprep.mubr.f32.mxu0 0.0
        %1475 = vmatmul.mubr.f32.gmra.mrb[0].mxu0 %v1283
        %v1476 = vpop.f32.mrb[0].mxu0
        %v1477 = vadd.f32 %v1403, %v1476
        %v1478 = vpop.f32.mrb[0].mxu0
        %1479 = vdwg.mxu0
        %v1480 = vld [vmem:[%s16] sm:$0xff]
        %v1481 = vld [vmem:[%s16 + $0x8] sm:$0xff]
        %v1482 = vld [vmem:[%s16 + $0x10] sm:$0xff]
        %v1483 = vld [vmem:[%s16 + $0x18] sm:$0xff]
        %v1484 = vld [vmem:[%s16 + $0x20] sm:$0xff]
        %v1485 = vld [vmem:[%s16 + $0x28] sm:$0xff]
        %v1486 = vld [vmem:[%s16 + $0x30] sm:$0xff]
        %v1487 = vld [vmem:[%s16 + $0x38] sm:$0xff]
        %v1488 = vld [vmem:[%s16 + $0x40] sm:$0xff]
        %v1489 = vld [vmem:[%s16 + $0x48] sm:$0xff]
        %v1490 = vld [vmem:[%s16 + $0x50] sm:$0xff]
        %v1491 = vld [vmem:[%s16 + $0x58] sm:$0xff]
        %v1492 = vld [vmem:[%s16 + $0x60] sm:$0xff]
        %v1493 = vld [vmem:[%s16 + $0x68] sm:$0xff]
        %v1494 = vld [vmem:[%s16 + $0x70] sm:$0xff]
        %v1495 = vld [vmem:[%s16 + $0x78] sm:$0xff]
        %v1496 = vld [vmem:[%s17] sm:$0x1]
        %v1498 = vlaneseq
        %v1499 = vshrl.u32 %v1498, 7
        %v1500 = vsub.s32 0, %v1499
        %v1501 = vrot.slane %v1496, %v1500
        %1503 = vmatprep.subr.mxu0 0.0
        %1504 = vmatpush1.msra.mxu0 %v1480
        %1505 = vmatprep.subr.mxu0 0.0
        %1506 = vmatpush1.msra.mxu0 %v1481
        %1507 = vmatprep.subr.mxu0 0.0
        %1508 = vmatpush1.msra.mxu0 %v1482
        %1509 = vmatprep.subr.mxu0 0.0
        %1510 = vmatpush1.msra.mxu0 %v1483
        %1511 = vmatprep.subr.mxu0 0.0
        %1512 = vmatpush1.msra.mxu0 %v1484
        %1513 = vmatprep.subr.mxu0 0.0
        %1514 = vmatpush1.msra.mxu0 %v1485
        %1515 = vmatprep.subr.mxu0 0.0
        %1516 = vmatpush1.msra.mxu0 %v1486
        %1517 = vmatprep.subr.mxu0 0.0
        %1518 = vmatpush1.msra.mxu0 %v1487
        %1519 = vmatprep.subr.mxu0 0.0
        %1520 = vmatpush1.msra.mxu0 %v1488
        %1521 = vmatprep.subr.mxu0 0.0
        %1522 = vmatpush1.msra.mxu0 %v1489
        %1523 = vmatprep.subr.mxu0 0.0
        %1524 = vmatpush1.msra.mxu0 %v1490
        %1525 = vmatprep.subr.mxu0 0.0
        %1526 = vmatpush1.msra.mxu0 %v1491
        %1527 = vmatprep.subr.mxu0 0.0
        %1528 = vmatpush1.msra.mxu0 %v1492
        %1529 = vmatprep.subr.mxu0 0.0
        %1530 = vmatpush1.msra.mxu0 %v1493
        %1531 = vmatprep.subr.mxu0 0.0
        %1532 = vmatpush1.msra.mxu0 %v1494
        %1533 = vmatprep.subr.mxu0 0.0
        %1534 = vmatpush1.msra.mxu0 %v1495
        %1535 = vmatprep.subr.mxu0 0.0
        %1536 = vmatpush1.msra.mxu0 0.0
        %1537 = vmatprep.subr.mxu0 0.0
        %1538 = vmatpush1.msra.mxu0 0.0
        %1539 = vmatprep.subr.mxu0 0.0
        %1540 = vmatpush1.msra.mxu0 0.0
        %1541 = vmatprep.subr.mxu0 0.0
        %1542 = vmatpush1.msra.mxu0 0.0
        %1543 = vmatprep.subr.mxu0 0.0
        %1544 = vmatpush1.msra.mxu0 0.0
        %1545 = vmatprep.subr.mxu0 0.0
        %1546 = vmatpush1.msra.mxu0 0.0
        %1547 = vmatprep.subr.mxu0 0.0
        %1548 = vmatpush1.msra.mxu0 0.0
        %1549 = vmatprep.subr.mxu0 0.0
        %1550 = vmatpush1.msra.mxu0 0.0
        %1551 = vmatprep.subr.mxu0 0.0
        %1552 = vmatpush1.msra.mxu0 0.0
        %1553 = vmatprep.subr.mxu0 0.0
        %1554 = vmatpush1.msra.mxu0 0.0
        %1555 = vmatprep.subr.mxu0 0.0
        %1556 = vmatpush1.msra.mxu0 0.0
        %1557 = vmatprep.subr.mxu0 0.0
        %1558 = vmatpush1.msra.mxu0 0.0
        %1559 = vmatprep.subr.mxu0 0.0
        %1560 = vmatpush1.msra.mxu0 0.0
        %1561 = vmatprep.subr.mxu0 0.0
        %1562 = vmatpush1.msra.mxu0 0.0
        %1563 = vmatprep.subr.mxu0 0.0
        %1564 = vmatpush1.msra.mxu0 0.0
        %1565 = vmatprep.subr.mxu0 0.0
        %1566 = vmatpush1.msra.mxu0 0.0
        %1567 = vmatprep.mubr.f32.mxu0 0.0
        %1568 = vmatmul.mubr.f32.gmra.mrb[0].mxu0 %v709
        %v1569 = vpop.f32.mrb[0].mxu0
        %v1570 = vadd.f32 %v1501, %v1569
        %v1571 = vpop.f32.mrb[0].mxu0
        %1572 = vmatprep.mubr.f32.mxu0 0.0
        %1573 = vmatmul.mubr.f32.gmra.mrb[0].mxu0 %v710
        %v1574 = vpop.f32.mrb[0].mxu0
        %v1575 = vadd.f32 %v1501, %v1574
        %v1576 = vpop.f32.mrb[0].mxu0
        %1577 = vdwg.mxu0
        %vm1578 = vcmask 64512
        %v1580 = vsel %vm1578, %v1472, 0
        %v1583 = vsel %vm1578, %v1477, 0
        %v1586 = vsel %vm1578, %v1570, 0
        %v1589 = vsel %vm1578, %v1575, 0
        %1591 = vmatprep.subr.mxu0 0.0
        %1592 = vmatpush1.xpose.msra.mxu0 %v1586
        %1593 = vmatprep.subr.mxu0 0.0
        %1594 = vmatpush1.xpose.msra.mxu0 %v1589
        %1595 = vmatprep.subr.mxu0 0.0
        %1596 = vmatpush1.xpose.msra.mxu0 0.0
        %1597 = vmatprep.subr.mxu0 0.0
        %1598 = vmatpush1.xpose.msra.mxu0 0.0
        %1599 = vmatprep.subr.mxu0 0.0
        %1600 = vmatpush1.xpose.msra.mxu0 0.0
        %1601 = vmatprep.subr.mxu0 0.0
        %1602 = vmatpush1.xpose.msra.mxu0 0.0
        %1603 = vmatprep.subr.mxu0 0.0
        %1604 = vmatpush1.xpose.msra.mxu0 0.0
        %1605 = vmatprep.subr.mxu0 0.0
        %1606 = vmatpush1.xpose.msra.mxu0 0.0
        %1607 = vmatprep.subr.mxu0 0.0
        %1608 = vmatpush1.xpose.msra.mxu0 0.0
        %1609 = vmatprep.subr.mxu0 0.0
        %1610 = vmatpush1.xpose.msra.mxu0 0.0
        %1611 = vmatprep.subr.mxu0 0.0
        %1612 = vmatpush1.xpose.msra.mxu0 0.0
        %1613 = vmatprep.subr.mxu0 0.0
        %1614 = vmatpush1.xpose.msra.mxu0 0.0
        %1615 = vmatprep.subr.mxu0 0.0
        %1616 = vmatpush1.xpose.msra.mxu0 0.0
        %1617 = vmatprep.subr.mxu0 0.0
        %1618 = vmatpush1.xpose.msra.mxu0 0.0
        %1619 = vmatprep.subr.mxu0 0.0
        %1620 = vmatpush1.xpose.msra.mxu0 0.0
        %1621 = vmatprep.subr.mxu0 0.0
        %1622 = vmatpush1.xpose.msra.mxu0 0.0
        %1623 = vmatprep.subr.mxu0 0.0
        %1624 = vmatpush1.xpose.msra.mxu0 0.0
        %1625 = vmatprep.subr.mxu0 0.0
        %1626 = vmatpush1.xpose.msra.mxu0 0.0
        %1627 = vmatprep.subr.mxu0 0.0
        %1628 = vmatpush1.xpose.msra.mxu0 0.0
        %1629 = vmatprep.subr.mxu0 0.0
        %1630 = vmatpush1.xpose.msra.mxu0 0.0
        %1631 = vmatprep.subr.mxu0 0.0
        %1632 = vmatpush1.xpose.msra.mxu0 0.0
        %1633 = vmatprep.subr.mxu0 0.0
        %1634 = vmatpush1.xpose.msra.mxu0 0.0
        %1635 = vmatprep.subr.mxu0 0.0
        %1636 = vmatpush1.xpose.msra.mxu0 0.0
        %1637 = vmatprep.subr.mxu0 0.0
        %1638 = vmatpush1.xpose.msra.mxu0 0.0
        %1639 = vmatprep.subr.mxu0 0.0
        %1640 = vmatpush1.xpose.msra.mxu0 0.0
        %1641 = vmatprep.subr.mxu0 0.0
        %1642 = vmatpush1.xpose.msra.mxu0 0.0
        %1643 = vmatprep.subr.mxu0 0.0
        %1644 = vmatpush1.xpose.msra.mxu0 0.0
        %1645 = vmatprep.subr.mxu0 0.0
        %1646 = vmatpush1.xpose.msra.mxu0 0.0
        %1647 = vmatprep.subr.mxu0 0.0
        %1648 = vmatpush1.xpose.msra.mxu0 0.0
        %1649 = vmatprep.subr.mxu0 0.0
        %1650 = vmatpush1.xpose.msra.mxu0 0.0
        %1651 = vmatprep.subr.mxu0 0.0
        %1652 = vmatpush1.xpose.msra.mxu0 0.0
        %1653 = vmatprep.subr.mxu0 0.0
        %1654 = vmatpush1.xpose.msra.mxu0 0.0
        %1655 = vmatprep.mubr.f32.mxu0 0.0
        %1656 = vmatmul.mubr.f32.gmra.mrb[0].mxu0 %v1580
        %v1657 = vpop.f32.mrb[0].mxu0
        %v1658 = vadd.f32 0.0, %v1657
        %v1659 = vpop.f32.mrb[0].mxu0
        %1660 = vmatprep.mubr.f32.mxu0 0.0
        %1661 = vmatmul.mubr.f32.gmra.mrb[0].mxu0 %v1583
        %v1662 = vpop.f32.mrb[0].mxu0
        %v1663 = vadd.f32 0.0, %v1662
        %v1664 = vpop.f32.mrb[0].mxu0
        %1665 = vdwg.mxu0
        %v1667 = vsel %vm1005, %v1658, 0
        %v1670 = vsel %vm1005, %v1663, 0
        %1672 = vmatprep.subr.mxu0 0.0
        %1673 = vmatpush1.msra.mxu0 %v1374
        %1674 = vmatprep.subr.mxu0 0.0
        %1675 = vmatpush1.msra.mxu0 %v1379
        %1676 = vmatprep.subr.mxu0 0.0
        %1677 = vmatpush1.msra.mxu0 0.0
        %1678 = vmatprep.subr.mxu0 0.0
        %1679 = vmatpush1.msra.mxu0 0.0
        %1680 = vmatprep.subr.mxu0 0.0
        %1681 = vmatpush1.msra.mxu0 0.0
        %1682 = vmatprep.subr.mxu0 0.0
        %1683 = vmatpush1.msra.mxu0 0.0
        %1684 = vmatprep.subr.mxu0 0.0
        %1685 = vmatpush1.msra.mxu0 0.0
        %1686 = vmatprep.subr.mxu0 0.0
        %1687 = vmatpush1.msra.mxu0 0.0
        %1688 = vmatprep.subr.mxu0 0.0
        %1689 = vmatpush1.msra.mxu0 0.0
        %1690 = vmatprep.subr.mxu0 0.0
        %1691 = vmatpush1.msra.mxu0 0.0
        %1692 = vmatprep.subr.mxu0 0.0
        %1693 = vmatpush1.msra.mxu0 0.0
        %1694 = vmatprep.subr.mxu0 0.0
        %1695 = vmatpush1.msra.mxu0 0.0
        %1696 = vmatprep.subr.mxu0 0.0
        %1697 = vmatpush1.msra.mxu0 0.0
        %1698 = vmatprep.subr.mxu0 0.0
        %1699 = vmatpush1.msra.mxu0 0.0
        %1700 = vmatprep.subr.mxu0 0.0
        %1701 = vmatpush1.msra.mxu0 0.0
        %1702 = vmatprep.subr.mxu0 0.0
        %1703 = vmatpush1.msra.mxu0 0.0
        %1704 = vmatprep.subr.mxu0 0.0
        %1705 = vmatpush1.msra.mxu0 0.0
        %1706 = vmatprep.subr.mxu0 0.0
        %1707 = vmatpush1.msra.mxu0 0.0
        %1708 = vmatprep.subr.mxu0 0.0
        %1709 = vmatpush1.msra.mxu0 0.0
        %1710 = vmatprep.subr.mxu0 0.0
        %1711 = vmatpush1.msra.mxu0 0.0
        %1712 = vmatprep.subr.mxu0 0.0
        %1713 = vmatpush1.msra.mxu0 0.0
        %1714 = vmatprep.subr.mxu0 0.0
        %1715 = vmatpush1.msra.mxu0 0.0
        %1716 = vmatprep.subr.mxu0 0.0
        %1717 = vmatpush1.msra.mxu0 0.0
        %1718 = vmatprep.subr.mxu0 0.0
        %1719 = vmatpush1.msra.mxu0 0.0
        %1720 = vmatprep.subr.mxu0 0.0
        %1721 = vmatpush1.msra.mxu0 0.0
        %1722 = vmatprep.subr.mxu0 0.0
        %1723 = vmatpush1.msra.mxu0 0.0
        %1724 = vmatprep.subr.mxu0 0.0
        %1725 = vmatpush1.msra.mxu0 0.0
        %1726 = vmatprep.subr.mxu0 0.0
        %1727 = vmatpush1.msra.mxu0 0.0
        %1728 = vmatprep.subr.mxu0 0.0
        %1729 = vmatpush1.msra.mxu0 0.0
        %1730 = vmatprep.subr.mxu0 0.0
        %1731 = vmatpush1.msra.mxu0 0.0
        %1732 = vmatprep.subr.mxu0 0.0
        %1733 = vmatpush1.msra.mxu0 0.0
        %1734 = vmatprep.subr.mxu0 0.0
        %1735 = vmatpush1.msra.mxu0 0.0
        %1736 = vmatprep.mubr.f32.mxu0 0.0
        %1737 = vmatmul.mubr.f32.gmra.mrb[0].mxu0 %v1667
        %v1738 = vpop.f32.mrb[0].mxu0
        %v1739 = vadd.f32 0.0, %v1738
        %v1740 = vpop.f32.mrb[0].mxu0
        %1741 = vmatprep.mubr.f32.mxu0 0.0
        %1742 = vmatmul.mubr.f32.gmra.mrb[0].mxu0 %v1670
        %v1743 = vpop.f32.mrb[0].mxu0
        %v1744 = vadd.f32 0.0, %v1743
        %v1745 = vpop.f32.mrb[0].mxu0
        %1746 = vdwg.mxu0
        %v1747 = vld [vmem:[%s18] sm:$0xff]
        %v1748 = vld [vmem:[%s19] sm:$0x1]
        %v1750 = vlaneseq
        %v1751 = vshrl.u32 %v1750, 7
        %v1752 = vsub.s32 0, %v1751
        %v1753 = vrot.slane %v1748, %v1752
        %v1756 = vsel %vm1578, %v1739, 0
        %v1759 = vsel %vm1578, %v1744, 0
        %1761 = vmatprep.subr.mxu0 0.0
        %1762 = vmatpush1.msra.mxu0 %v1747
        %1763 = vmatprep.subr.mxu0 0.0
        %1764 = vmatpush1.msra.mxu0 0.0
        %1765 = vmatprep.subr.mxu0 0.0
        %1766 = vmatpush1.msra.mxu0 0.0
        %1767 = vmatprep.subr.mxu0 0.0
        %1768 = vmatpush1.msra.mxu0 0.0
        %1769 = vmatprep.subr.mxu0 0.0
        %1770 = vmatpush1.msra.mxu0 0.0
        %1771 = vmatprep.subr.mxu0 0.0
        %1772 = vmatpush1.msra.mxu0 0.0
        %1773 = vmatprep.subr.mxu0 0.0
        %1774 = vmatpush1.msra.mxu0 0.0
        %1775 = vmatprep.subr.mxu0 0.0
        %1776 = vmatpush1.msra.mxu0 0.0
        %1777 = vmatprep.subr.mxu0 0.0
        %1778 = vmatpush1.msra.mxu0 0.0
        %1779 = vmatprep.subr.mxu0 0.0
        %1780 = vmatpush1.msra.mxu0 0.0
        %1781 = vmatprep.subr.mxu0 0.0
        %1782 = vmatpush1.msra.mxu0 0.0
        %1783 = vmatprep.subr.mxu0 0.0
        %1784 = vmatpush1.msra.mxu0 0.0
        %1785 = vmatprep.subr.mxu0 0.0
        %1786 = vmatpush1.msra.mxu0 0.0
        %1787 = vmatprep.subr.mxu0 0.0
        %1788 = vmatpush1.msra.mxu0 0.0
        %1789 = vmatprep.subr.mxu0 0.0
        %1790 = vmatpush1.msra.mxu0 0.0
        %1791 = vmatprep.subr.mxu0 0.0
        %1792 = vmatpush1.msra.mxu0 0.0
        %1793 = vmatprep.subr.mxu0 0.0
        %1794 = vmatpush1.msra.mxu0 0.0
        %1795 = vmatprep.subr.mxu0 0.0
        %1796 = vmatpush1.msra.mxu0 0.0
        %1797 = vmatprep.subr.mxu0 0.0
        %1798 = vmatpush1.msra.mxu0 0.0
        %1799 = vmatprep.subr.mxu0 0.0
        %1800 = vmatpush1.msra.mxu0 0.0
        %1801 = vmatprep.subr.mxu0 0.0
        %1802 = vmatpush1.msra.mxu0 0.0
        %1803 = vmatprep.subr.mxu0 0.0
        %1804 = vmatpush1.msra.mxu0 0.0
        %1805 = vmatprep.subr.mxu0 0.0
        %1806 = vmatpush1.msra.mxu0 0.0
        %1807 = vmatprep.subr.mxu0 0.0
        %1808 = vmatpush1.msra.mxu0 0.0
        %1809 = vmatprep.subr.mxu0 0.0
        %1810 = vmatpush1.msra.mxu0 0.0
        %1811 = vmatprep.subr.mxu0 0.0
        %1812 = vmatpush1.msra.mxu0 0.0
        %1813 = vmatprep.subr.mxu0 0.0
        %1814 = vmatpush1.msra.mxu0 0.0
        %1815 = vmatprep.subr.mxu0 0.0
        %1816 = vmatpush1.msra.mxu0 0.0
        %1817 = vmatprep.subr.mxu0 0.0
        %1818 = vmatpush1.msra.mxu0 0.0
        %1819 = vmatprep.subr.mxu0 0.0
        %1820 = vmatpush1.msra.mxu0 0.0
        %1821 = vmatprep.subr.mxu0 0.0
        %1822 = vmatpush1.msra.mxu0 0.0
        %1823 = vmatprep.subr.mxu0 0.0
        %1824 = vmatpush1.msra.mxu0 0.0
        %1825 = vmatprep.mubr.f32.mxu0 0.0
        %1826 = vmatmul.mubr.f32.gmra.mrb[0].mxu0 %v1756
        %v1827 = vpop.f32.mrb[0].mxu0
        %v1828 = vadd.f32 %v1753, %v1827
        %v1829 = vpop.f32.mrb[0].mxu0
        %1830 = vmatprep.mubr.f32.mxu0 0.0
        %1831 = vmatmul.mubr.f32.gmra.mrb[0].mxu0 %v1759
        %v1832 = vpop.f32.mrb[0].mxu0
        %v1833 = vadd.f32 %v1753, %v1832
        %v1834 = vpop.f32.mrb[0].mxu0
        %1835 = vdwg.mxu0
        %v1836 = vld [vmem:[%s20] sm:$0x1]
        %v1838 = vlaneseq
        %v1839 = vshrl.u32 %v1838, 7
        %v1840 = vsub.s32 0, %v1839
        %v1841 = vrot.slane %v1836, %v1840
        %v1843 = vmul.f32 %v1828, %v1841
        %v1844 = vmul.f32 %v1833, %v1841
        %v1845 = vld [vmem:[%s21] sm:$0x1]
        %v1847 = vlaneseq
        %v1848 = vshrl.u32 %v1847, 7
        %v1849 = vsub.s32 0, %v1848
        %v1850 = vrot.slane %v1845, %v1849
        %v1852 = vadd.f32 %v1843, %v1850
        %v1853 = vadd.f32 %v1844, %v1850
        %v1854 = vadd.f32 %v1852, %v1282
        %v1855 = vadd.f32 %v1853, %v1283
        %1856 = vst [vmem:[%s693] sm:$0xff] %v1854
        %1857 = vst [vmem:[%s693 + $0x8] sm:$0xff] %v1855
        %s1858 = sand.u32 %s516, 1
        %s1859 = scalar_lea.sflag [#allocation3], %s1858
        %s1860 = sand.u32 %s516, 1
        %s1861 = smul.addr %s1860, 16
        %s1862 = scalar_lea.vmem [#allocation2], %s1861
        // Predicated region
        $region109: #{tpu_custom_call.1} parent=107 // pred_check
          %p1863 = pneg %p526
        $region110: #{tpu_custom_call.1} parent=107 // pred_check_branch
          %1865 = sbr.rel (%p1863) target = $region112
        $region111: #{tpu_custom_call.1} parent=107 // pred_region
          %s1866 = smul.u32 2, %s36
          %s1868 = ssub.s32 256, 256
          %1869 = vsyncadd %s1859, %s1868
          %s1870 = smul.addr %s1866, 128
          %s1871 = scalar_lea.hbm %s22, %s1870
          %s1872 = sshll.u32 %s1862, 4
          %s1873 = int_to_ptr.vmem [resolvable:$true] %s1872
          %1878 = dma.vmem_to_hbm [thread:$0]  %s1873, 256, %s1871, %s1859, 128, 128, 8
        $region112: #{tpu_custom_call.1} parent=107 // pred_fallthru
          _
      $region108: #{tpu_custom_call.1} parent=5 // pred_fallthru
        _
      %p1879 = scmp.le.s32.totalorder 2, %s31
      // Predicated region
      $region113: #{tpu_custom_call.1} parent=5 // pred_check
        %p1880 = pneg %p1879
      $region114: #{tpu_custom_call.1} parent=5 // pred_check_branch
        %1882 = sbr.rel (%p1880) target = $region116
      $region115: #{tpu_custom_call.1} parent=5 // pred_region
        %s1883 = ssub.s32 %s31, 2
        // Predicated region
        $region117: #{tpu_custom_call.1} parent=115 // pred_check
          %p1884 = pneg %p532
        $region118: #{tpu_custom_call.1} parent=115 // pred_check_branch
          %1886 = sbr.rel (%p1884) target = $region120
        $region119: #{tpu_custom_call.1} parent=115 // pred_region
          %s1887 = sand.u32 %s517, 1
          %s1888 = scalar_lea.sflag [#allocation3], %s1887
          %s1889 = sand.u32 %s517, 1
          %s1890 = smul.addr %s1889, 16
          %s1891 = scalar_lea.vmem [#allocation2], %s1890
          %1892 = dma.done %s1888, 256
        $region120: #{tpu_custom_call.1} parent=115 // pred_fallthru
          _
      $region116: #{tpu_custom_call.1} parent=5 // pred_fallthru
        _
    $region6: #{tpu_custom_call.1} parent=1 // loop_footer
      %s35 = sadd.s32 1, %s31
    $region7: #{tpu_custom_call.1} parent=1 // loop_footer_branch
      %30 = sbr.rel target = $region3
    $region8: #{tpu_custom_call.1} parent=1 // loop_exit
      _
    %1893 = vsyncpa [#allocation3], 1
    %s1894 = scalar_lea.sflag [#allocation3], 1
    %1895 = vsyncpa %s1894, 1

</llo_original>
